<compile_context>
chip_gen: v7x
topology: tpu7x:2x2x1
jax: 0.10.0
libtpu: 0.0.40
codegen_flags: <defaults>
</compile_context>

<pallas_src>
import jax
import jax.numpy as jnp
from jax import lax
from jax.experimental import pallas as pl
from jax.experimental.pallas import tpu as pltpu

BETA = 0.95
THRESHOLD = 1.0


def _snn_kernel(x_ref, w1_ref, b1_ref, w2_ref, b2_ref, rec_ref):
    """Single grid-less invocation: whole time loop, state lives in vregs.

    Phase A: layer-1 LIF recurrence (pure VPU, no matmul on the serial chain).
    Phase B: ALL layer-2 currents with ONE MXU call on the stacked spike block.
    Phase C: layer-2 LIF recurrence over per-step row slices of that result.

    rec_ref row layout: [spk2(t0) | mem2(t0) | spk2(t1) | mem2(t1) | ...]
    so the single output store is lane-dense.
    """
    B = x_ref.shape[0]
    O = w2_ref.shape[1]
    num_steps = rec_ref.shape[1] // (2 * O)

    # ---- hoisted: layer-1 current is time-invariant (x, w1, b1 constant) ----
    cur1 = jnp.dot(x_ref[...], w1_ref[...],
                   precision=lax.Precision.HIGHEST,
                   preferred_element_type=jnp.float32) + b1_ref[...]
    H = cur1.shape[1]

    # ---- Phase A: layer-1 recurrence (subtract reset; reset(t) == spk(t-1),
    # threshold == 1.0 so the *threshold multiply is dropped). Membranes start
    # at zero (init_leaky) so the step-0 reset is 0.
    mem1 = jnp.zeros((B, H), jnp.float32)
    spk1 = jnp.zeros((B, H), jnp.float32)          # spk(t-1)
    spk1_steps = []
    for _ in range(num_steps):                      # small static trip count
        mem1 = BETA * mem1 + cur1 - spk1
        spk1 = (mem1 > THRESHOLD).astype(jnp.float32)
        spk1_steps.append(spk1)

    # ---- Phase B: one (num_steps*B, H) x (H, O) matmul instead of num_steps
    # tiny M=B calls — removes num_steps-1 MXU push->pop round-trips.
    spk1_all = jnp.concatenate(spk1_steps, axis=0)              # (num_steps*B, H)
    cur2_all = jnp.dot(spk1_all, w2_ref[...],
                       precision=lax.Precision.HIGHEST,
                       preferred_element_type=jnp.float32) + b2_ref[...]

    # ---- Phase C: layer-2 recurrence (pure VPU). Recordings packed per step
    # into one (B, 2*O) value to keep the live-vreg count ~num_steps.
    # TODO(synk): for num_steps >~ 24 flush chunks to a VMEM scratch slab to
    # stay under the 64-vreg budget.
    mem2 = jnp.zeros((B, O), jnp.float32)
    spk2 = jnp.zeros((B, O), jnp.float32)
    recs = []
    for t in range(num_steps):
        cur2 = cur2_all[t * B:(t + 1) * B, :]
        mem2 = BETA * mem2 + cur2 - spk2
        spk2 = (mem2 > THRESHOLD).astype(jnp.float32)
        recs.append(jnp.concatenate([spk2, mem2], axis=-1))     # (B, 2*O)

    # One lane-dense store of all recordings (HBM writeback happens once).
    rec_ref[...] = jnp.concatenate(recs, axis=-1)


def snn_net_forward(x, w1, b1, w2, b2, num_steps):
    """Pallas implementation of Net.forward (300-input single-sensor path).

    Weights are stored transposed as (in, out) so the kernel does x @ W + b.
    Returns (spk2_rec, mem2_rec), each (num_steps, B, num_outputs).
    """
    assert x.shape[1] == 300, "only the FlaSen==1 (300-input) path is implemented"
    B = x.shape[0]
    O = w2.shape[1]

    vmem = lambda: pl.BlockSpec(memory_space=pltpu.MemorySpace.VMEM)
    rec = pl.pallas_call(
        _snn_kernel,
        out_shape=jax.ShapeDtypeStruct((B, num_steps * 2 * O), jnp.float32),
        in_specs=[vmem() for _ in range(5)],
        out_specs=vmem(),
    )(x, w1, b1, w2, b2)

    # Split the lane-dense slab back into the PyTorch-shaped recordings.
    rec = rec.reshape(B, num_steps, 2, O)
    spk_rec = jnp.transpose(rec[:, :, 0, :], (1, 0, 2))
    mem_rec = jnp.transpose(rec[:, :, 1, :], (1, 0, 2))
    return spk_rec, mem_rec


def _reference_forward(x, w1, b1, w2, b2, num_steps):
    """Pure-JAX reference mirroring the PyTorch/snntorch loop exactly."""
    B = x.shape[0]
    H = w1.shape[1]
    O = w2.shape[1]
    mem1 = jnp.zeros((B, H), jnp.float32)
    mem2 = jnp.zeros((B, O), jnp.float32)
    spk_rec, mem_rec = [], []
    for _ in range(num_steps):
        cur1 = jnp.dot(x, w1, precision=lax.Precision.HIGHEST) + b1
        reset1 = (mem1 > THRESHOLD).astype(jnp.float32)
        mem1 = BETA * mem1 + cur1 - reset1 * THRESHOLD
        spk1 = (mem1 > THRESHOLD).astype(jnp.float32)
        cur2 = jnp.dot(spk1, w2, precision=lax.Precision.HIGHEST) + b2
        reset2 = (mem2 > THRESHOLD).astype(jnp.float32)
        mem2 = BETA * mem2 + cur2 - reset2 * THRESHOLD
        spk2 = (mem2 > THRESHOLD).astype(jnp.float32)
        spk_rec.append(spk2)
        mem_rec.append(mem2)
    return jnp.stack(spk_rec, 0), jnp.stack(mem_rec, 0)


if __name__ == "__main__":
    # Shapes implied by the module: num_inputs=300 (forward hardcodes the
    # 300-wide single-sensor path); small hidden/output/steps for the demo.
    B, NUM_INPUTS, NUM_HIDDEN, NUM_OUTPUTS, NUM_STEPS = 2, 300, 32, 8, 8

    key = jax.random.PRNGKey(0)
    kx, kw1, kb1, kw2, kb2 = jax.random.split(key, 5)

    x = jax.random.normal(kx, (B, NUM_INPUTS), jnp.float32)

    # deterministic nn.Linear-style init (uniform +-1/sqrt(fan_in)); weights
    # stored as (in, out) so the kernel computes x @ W + b.
    lim1 = 1.0 / (NUM_INPUTS ** 0.5)
    w1 = jax.random.uniform(kw1, (NUM_INPUTS, NUM_HIDDEN), jnp.float32, -lim1, lim1)
    b1 = jax.random.uniform(kb1, (1, NUM_HIDDEN), jnp.float32, -lim1, lim1)
    lim2 = 1.0 / (NUM_HIDDEN ** 0.5)
    w2 = jax.random.uniform(kw2, (NUM_HIDDEN, NUM_OUTPUTS), jnp.float32, -lim2, lim2)
    b2 = jax.random.uniform(kb2, (1, NUM_OUTPUTS), jnp.float32, -lim2, lim2)

    spk_rec, mem_rec = snn_net_forward(x, w1, b1, w2, b2, NUM_STEPS)
    jax.block_until_ready((spk_rec, mem_rec))

    ref_spk, ref_mem = _reference_forward(x, w1, b1, w2, b2, NUM_STEPS)
    assert spk_rec.shape == (NUM_STEPS, B, NUM_OUTPUTS)
    assert mem_rec.shape == (NUM_STEPS, B, NUM_OUTPUTS)
    assert jnp.array_equal(spk_rec, ref_spk)          # spikes must match exactly
    assert jnp.allclose(mem_rec, ref_mem, atol=1e-5)

    print("KERNEL_OK")
</pallas_src>

<mosaic_0001>
module attributes {stable_mosaic.version = 11 : i64} {
  func.func @_snn_kernel(%arg0: memref<2x300xf32, #tpu.memory_space<vmem>>, %arg1: memref<300x32xf32, #tpu.memory_space<vmem>>, %arg2: memref<1x32xf32, #tpu.memory_space<vmem>>, %arg3: memref<32x8xf32, #tpu.memory_space<vmem>>, %arg4: memref<1x8xf32, #tpu.memory_space<vmem>>, %arg5: memref<2x128xf32, #tpu.memory_space<vmem>>) attributes {dimension_semantics = [], scalar_prefetch = 0 : i64, scratch_operands = 0 : i64, tpu.core_type = #tpu.core_type<tc>} {
    %c0 = arith.constant 0 : index
    %c0_0 = arith.constant 0 : index
    %0 = vector.load %arg0[%c0, %c0_0] : memref<2x300xf32, #tpu.memory_space<vmem>>, vector<2x300xf32>
    %c0_1 = arith.constant 0 : index
    %c0_2 = arith.constant 0 : index
    %1 = vector.load %arg1[%c0_1, %c0_2] : memref<300x32xf32, #tpu.memory_space<vmem>>, vector<300x32xf32>
    %cst = arith.constant dense<0.000000e+00> : vector<2x32xf32>
    %2 = tpu.matmul %0, %1, %cst {dimension_numbers = #tpu.dot_dimension_numbers<[1], [0], [0], [1], [0, 0, 1, 1], [], []>, precision = #tpu.contract_precision<fp32>} : vector<2x300xf32>, vector<300x32xf32>, vector<2x32xf32> -> vector<2x32xf32>
    %c0_3 = arith.constant 0 : index
    %c0_4 = arith.constant 0 : index
    %3 = vector.load %arg2[%c0_3, %c0_4] : memref<1x32xf32, #tpu.memory_space<vmem>>, vector<1x32xf32>
    %4 = vector.broadcast %3 : vector<1x32xf32> to vector<2x32xf32>
    %5 = arith.addf %2, %4 : vector<2x32xf32>
    %cst_5 = arith.constant 0.000000e+00 : f32
    %6 = vector.broadcast %cst_5 : f32 to vector<2x32xf32>
    %cst_6 = arith.constant 0.000000e+00 : f32
    %7 = vector.broadcast %cst_6 : f32 to vector<2x32xf32>
    %cst_7 = arith.constant 0.949999988 : f32
    %8 = vector.broadcast %cst_7 : f32 to vector<2x32xf32>
    %9 = arith.mulf %8, %6 : vector<2x32xf32>
    %10 = arith.addf %9, %5 : vector<2x32xf32>
    %11 = arith.subf %10, %7 : vector<2x32xf32>
    %cst_8 = arith.constant 1.000000e+00 : f32
    %12 = vector.broadcast %cst_8 : f32 to vector<2x32xf32>
    %13 = arith.cmpf ogt, %11, %12 : vector<2x32xf32>
    %14 = arith.extui %13 : vector<2x32xi1> to vector<2x32xi32>
    %15 = arith.sitofp %14 : vector<2x32xi32> to vector<2x32xf32>
    %cst_9 = arith.constant 0.949999988 : f32
    %16 = vector.broadcast %cst_9 : f32 to vector<2x32xf32>
    %17 = arith.mulf %16, %11 : vector<2x32xf32>
    %18 = arith.addf %17, %5 : vector<2x32xf32>
    %19 = arith.subf %18, %15 : vector<2x32xf32>
    %cst_10 = arith.constant 1.000000e+00 : f32
    %20 = vector.broadcast %cst_10 : f32 to vector<2x32xf32>
    %21 = arith.cmpf ogt, %19, %20 : vector<2x32xf32>
    %22 = arith.extui %21 : vector<2x32xi1> to vector<2x32xi32>
    %23 = arith.sitofp %22 : vector<2x32xi32> to vector<2x32xf32>
    %cst_11 = arith.constant 0.949999988 : f32
    %24 = vector.broadcast %cst_11 : f32 to vector<2x32xf32>
    %25 = arith.mulf %24, %19 : vector<2x32xf32>
    %26 = arith.addf %25, %5 : vector<2x32xf32>
    %27 = arith.subf %26, %23 : vector<2x32xf32>
    %cst_12 = arith.constant 1.000000e+00 : f32
    %28 = vector.broadcast %cst_12 : f32 to vector<2x32xf32>
    %29 = arith.cmpf ogt, %27, %28 : vector<2x32xf32>
    %30 = arith.extui %29 : vector<2x32xi1> to vector<2x32xi32>
    %31 = arith.sitofp %30 : vector<2x32xi32> to vector<2x32xf32>
    %cst_13 = arith.constant 0.949999988 : f32
    %32 = vector.broadcast %cst_13 : f32 to vector<2x32xf32>
    %33 = arith.mulf %32, %27 : vector<2x32xf32>
    %34 = arith.addf %33, %5 : vector<2x32xf32>
    %35 = arith.subf %34, %31 : vector<2x32xf32>
    %cst_14 = arith.constant 1.000000e+00 : f32
    %36 = vector.broadcast %cst_14 : f32 to vector<2x32xf32>
    %37 = arith.cmpf ogt, %35, %36 : vector<2x32xf32>
    %38 = arith.extui %37 : vector<2x32xi1> to vector<2x32xi32>
    %39 = arith.sitofp %38 : vector<2x32xi32> to vector<2x32xf32>
    %cst_15 = arith.constant 0.949999988 : f32
    %40 = vector.broadcast %cst_15 : f32 to vector<2x32xf32>
    %41 = arith.mulf %40, %35 : vector<2x32xf32>
    %42 = arith.addf %41, %5 : vector<2x32xf32>
    %43 = arith.subf %42, %39 : vector<2x32xf32>
    %cst_16 = arith.constant 1.000000e+00 : f32
    %44 = vector.broadcast %cst_16 : f32 to vector<2x32xf32>
    %45 = arith.cmpf ogt, %43, %44 : vector<2x32xf32>
    %46 = arith.extui %45 : vector<2x32xi1> to vector<2x32xi32>
    %47 = arith.sitofp %46 : vector<2x32xi32> to vector<2x32xf32>
    %cst_17 = arith.constant 0.949999988 : f32
    %48 = vector.broadcast %cst_17 : f32 to vector<2x32xf32>
    %49 = arith.mulf %48, %43 : vector<2x32xf32>
    %50 = arith.addf %49, %5 : vector<2x32xf32>
    %51 = arith.subf %50, %47 : vector<2x32xf32>
    %cst_18 = arith.constant 1.000000e+00 : f32
    %52 = vector.broadcast %cst_18 : f32 to vector<2x32xf32>
    %53 = arith.cmpf ogt, %51, %52 : vector<2x32xf32>
    %54 = arith.extui %53 : vector<2x32xi1> to vector<2x32xi32>
    %55 = arith.sitofp %54 : vector<2x32xi32> to vector<2x32xf32>
    %cst_19 = arith.constant 0.949999988 : f32
    %56 = vector.broadcast %cst_19 : f32 to vector<2x32xf32>
    %57 = arith.mulf %56, %51 : vector<2x32xf32>
    %58 = arith.addf %57, %5 : vector<2x32xf32>
    %59 = arith.subf %58, %55 : vector<2x32xf32>
    %cst_20 = arith.constant 1.000000e+00 : f32
    %60 = vector.broadcast %cst_20 : f32 to vector<2x32xf32>
    %61 = arith.cmpf ogt, %59, %60 : vector<2x32xf32>
    %62 = arith.extui %61 : vector<2x32xi1> to vector<2x32xi32>
    %63 = arith.sitofp %62 : vector<2x32xi32> to vector<2x32xf32>
    %cst_21 = arith.constant 0.949999988 : f32
    %64 = vector.broadcast %cst_21 : f32 to vector<2x32xf32>
    %65 = arith.mulf %64, %59 : vector<2x32xf32>
    %66 = arith.addf %65, %5 : vector<2x32xf32>
    %67 = arith.subf %66, %63 : vector<2x32xf32>
    %cst_22 = arith.constant 1.000000e+00 : f32
    %68 = vector.broadcast %cst_22 : f32 to vector<2x32xf32>
    %69 = arith.cmpf ogt, %67, %68 : vector<2x32xf32>
    %70 = arith.extui %69 : vector<2x32xi1> to vector<2x32xi32>
    %71 = arith.sitofp %70 : vector<2x32xi32> to vector<2x32xf32>
    %72 = tpu.concatenate %15, %23, %31, %39, %47, %55, %63, %71 in 0 : vector<2x32xf32>, vector<2x32xf32>, vector<2x32xf32>, vector<2x32xf32>, vector<2x32xf32>, vector<2x32xf32>, vector<2x32xf32>, vector<2x32xf32> -> vector<16x32xf32>
    %c0_23 = arith.constant 0 : index
    %c0_24 = arith.constant 0 : index
    %73 = vector.load %arg3[%c0_23, %c0_24] : memref<32x8xf32, #tpu.memory_space<vmem>>, vector<32x8xf32>
    %cst_25 = arith.constant dense<0.000000e+00> : vector<16x8xf32>
    %74 = tpu.matmul %72, %73, %cst_25 {dimension_numbers = #tpu.dot_dimension_numbers<[1], [0], [0], [1], [0, 0, 1, 1], [], []>, precision = #tpu.contract_precision<fp32>} : vector<16x32xf32>, vector<32x8xf32>, vector<16x8xf32> -> vector<16x8xf32>
    %c0_26 = arith.constant 0 : index
    %c0_27 = arith.constant 0 : index
    %75 = vector.load %arg4[%c0_26, %c0_27] : memref<1x8xf32, #tpu.memory_space<vmem>>, vector<1x8xf32>
    %76 = vector.broadcast %75 : vector<1x8xf32> to vector<16x8xf32>
    %77 = arith.addf %74, %76 : vector<16x8xf32>
    %cst_28 = arith.constant 0.000000e+00 : f32
    %78 = vector.broadcast %cst_28 : f32 to vector<2x8xf32>
    %cst_29 = arith.constant 0.000000e+00 : f32
    %79 = vector.broadcast %cst_29 : f32 to vector<2x8xf32>
    %80 = vector.extract_strided_slice %77 {offsets = [0, 0], sizes = [2, 8], strides = [1, 1]} : vector<16x8xf32> to vector<2x8xf32>
    %cst_30 = arith.constant 0.949999988 : f32
    %81 = vector.broadcast %cst_30 : f32 to vector<2x8xf32>
    %82 = arith.mulf %81, %78 : vector<2x8xf32>
    %83 = arith.addf %82, %80 : vector<2x8xf32>
    %84 = arith.subf %83, %79 : vector<2x8xf32>
    %cst_31 = arith.constant 1.000000e+00 : f32
    %85 = vector.broadcast %cst_31 : f32 to vector<2x8xf32>
    %86 = arith.cmpf ogt, %84, %85 : vector<2x8xf32>
    %87 = arith.extui %86 : vector<2x8xi1> to vector<2x8xi32>
    %88 = arith.sitofp %87 : vector<2x8xi32> to vector<2x8xf32>
    %89 = tpu.concatenate %88, %84 in 1 : vector<2x8xf32>, vector<2x8xf32> -> vector<2x16xf32>
    %90 = vector.extract_strided_slice %77 {offsets = [2, 0], sizes = [2, 8], strides = [1, 1]} : vector<16x8xf32> to vector<2x8xf32>
    %cst_32 = arith.constant 0.949999988 : f32
    %91 = vector.broadcast %cst_32 : f32 to vector<2x8xf32>
    %92 = arith.mulf %91, %84 : vector<2x8xf32>
    %93 = arith.addf %92, %90 : vector<2x8xf32>
    %94 = arith.subf %93, %88 : vector<2x8xf32>
    %cst_33 = arith.constant 1.000000e+00 : f32
    %95 = vector.broadcast %cst_33 : f32 to vector<2x8xf32>
    %96 = arith.cmpf ogt, %94, %95 : vector<2x8xf32>
    %97 = arith.extui %96 : vector<2x8xi1> to vector<2x8xi32>
    %98 = arith.sitofp %97 : vector<2x8xi32> to vector<2x8xf32>
    %99 = tpu.concatenate %98, %94 in 1 : vector<2x8xf32>, vector<2x8xf32> -> vector<2x16xf32>
    %100 = vector.extract_strided_slice %77 {offsets = [4, 0], sizes = [2, 8], strides = [1, 1]} : vector<16x8xf32> to vector<2x8xf32>
    %cst_34 = arith.constant 0.949999988 : f32
    %101 = vector.broadcast %cst_34 : f32 to vector<2x8xf32>
    %102 = arith.mulf %101, %94 : vector<2x8xf32>
    %103 = arith.addf %102, %100 : vector<2x8xf32>
    %104 = arith.subf %103, %98 : vector<2x8xf32>
    %cst_35 = arith.constant 1.000000e+00 : f32
    %105 = vector.broadcast %cst_35 : f32 to vector<2x8xf32>
    %106 = arith.cmpf ogt, %104, %105 : vector<2x8xf32>
    %107 = arith.extui %106 : vector<2x8xi1> to vector<2x8xi32>
    %108 = arith.sitofp %107 : vector<2x8xi32> to vector<2x8xf32>
    %109 = tpu.concatenate %108, %104 in 1 : vector<2x8xf32>, vector<2x8xf32> -> vector<2x16xf32>
    %110 = vector.extract_strided_slice %77 {offsets = [6, 0], sizes = [2, 8], strides = [1, 1]} : vector<16x8xf32> to vector<2x8xf32>
    %cst_36 = arith.constant 0.949999988 : f32
    %111 = vector.broadcast %cst_36 : f32 to vector<2x8xf32>
    %112 = arith.mulf %111, %104 : vector<2x8xf32>
    %113 = arith.addf %112, %110 : vector<2x8xf32>
    %114 = arith.subf %113, %108 : vector<2x8xf32>
    %cst_37 = arith.constant 1.000000e+00 : f32
    %115 = vector.broadcast %cst_37 : f32 to vector<2x8xf32>
    %116 = arith.cmpf ogt, %114, %115 : vector<2x8xf32>
    %117 = arith.extui %116 : vector<2x8xi1> to vector<2x8xi32>
    %118 = arith.sitofp %117 : vector<2x8xi32> to vector<2x8xf32>
    %119 = tpu.concatenate %118, %114 in 1 : vector<2x8xf32>, vector<2x8xf32> -> vector<2x16xf32>
    %120 = vector.extract_strided_slice %77 {offsets = [8, 0], sizes = [2, 8], strides = [1, 1]} : vector<16x8xf32> to vector<2x8xf32>
    %cst_38 = arith.constant 0.949999988 : f32
    %121 = vector.broadcast %cst_38 : f32 to vector<2x8xf32>
    %122 = arith.mulf %121, %114 : vector<2x8xf32>
    %123 = arith.addf %122, %120 : vector<2x8xf32>
    %124 = arith.subf %123, %118 : vector<2x8xf32>
    %cst_39 = arith.constant 1.000000e+00 : f32
    %125 = vector.broadcast %cst_39 : f32 to vector<2x8xf32>
    %126 = arith.cmpf ogt, %124, %125 : vector<2x8xf32>
    %127 = arith.extui %126 : vector<2x8xi1> to vector<2x8xi32>
    %128 = arith.sitofp %127 : vector<2x8xi32> to vector<2x8xf32>
    %129 = tpu.concatenate %128, %124 in 1 : vector<2x8xf32>, vector<2x8xf32> -> vector<2x16xf32>
    %130 = vector.extract_strided_slice %77 {offsets = [10, 0], sizes = [2, 8], strides = [1, 1]} : vector<16x8xf32> to vector<2x8xf32>
    %cst_40 = arith.constant 0.949999988 : f32
    %131 = vector.broadcast %cst_40 : f32 to vector<2x8xf32>
    %132 = arith.mulf %131, %124 : vector<2x8xf32>
    %133 = arith.addf %132, %130 : vector<2x8xf32>
    %134 = arith.subf %133, %128 : vector<2x8xf32>
    %cst_41 = arith.constant 1.000000e+00 : f32
    %135 = vector.broadcast %cst_41 : f32 to vector<2x8xf32>
    %136 = arith.cmpf ogt, %134, %135 : vector<2x8xf32>
    %137 = arith.extui %136 : vector<2x8xi1> to vector<2x8xi32>
    %138 = arith.sitofp %137 : vector<2x8xi32> to vector<2x8xf32>
    %139 = tpu.concatenate %138, %134 in 1 : vector<2x8xf32>, vector<2x8xf32> -> vector<2x16xf32>
    %140 = vector.extract_strided_slice %77 {offsets = [12, 0], sizes = [2, 8], strides = [1, 1]} : vector<16x8xf32> to vector<2x8xf32>
    %cst_42 = arith.constant 0.949999988 : f32
    %141 = vector.broadcast %cst_42 : f32 to vector<2x8xf32>
    %142 = arith.mulf %141, %134 : vector<2x8xf32>
    %143 = arith.addf %142, %140 : vector<2x8xf32>
    %144 = arith.subf %143, %138 : vector<2x8xf32>
    %cst_43 = arith.constant 1.000000e+00 : f32
    %145 = vector.broadcast %cst_43 : f32 to vector<2x8xf32>
    %146 = arith.cmpf ogt, %144, %145 : vector<2x8xf32>
    %147 = arith.extui %146 : vector<2x8xi1> to vector<2x8xi32>
    %148 = arith.sitofp %147 : vector<2x8xi32> to vector<2x8xf32>
    %149 = tpu.concatenate %148, %144 in 1 : vector<2x8xf32>, vector<2x8xf32> -> vector<2x16xf32>
    %150 = vector.extract_strided_slice %77 {offsets = [14, 0], sizes = [2, 8], strides = [1, 1]} : vector<16x8xf32> to vector<2x8xf32>
    %cst_44 = arith.constant 0.949999988 : f32
    %151 = vector.broadcast %cst_44 : f32 to vector<2x8xf32>
    %152 = arith.mulf %151, %144 : vector<2x8xf32>
    %153 = arith.addf %152, %150 : vector<2x8xf32>
    %154 = arith.subf %153, %148 : vector<2x8xf32>
    %cst_45 = arith.constant 1.000000e+00 : f32
    %155 = vector.broadcast %cst_45 : f32 to vector<2x8xf32>
    %156 = arith.cmpf ogt, %154, %155 : vector<2x8xf32>
    %157 = arith.extui %156 : vector<2x8xi1> to vector<2x8xi32>
    %158 = arith.sitofp %157 : vector<2x8xi32> to vector<2x8xf32>
    %159 = tpu.concatenate %158, %154 in 1 : vector<2x8xf32>, vector<2x8xf32> -> vector<2x16xf32>
    %160 = tpu.concatenate %89, %99, %109, %119, %129, %139, %149, %159 in 1 : vector<2x16xf32>, vector<2x16xf32>, vector<2x16xf32>, vector<2x16xf32>, vector<2x16xf32>, vector<2x16xf32>, vector<2x16xf32>, vector<2x16xf32> -> vector<2x128xf32>
    %c0_46 = arith.constant 0 : index
    %c0_47 = arith.constant 0 : index
    %161 = vector.load %arg5[%c0_46, %c0_47] : memref<2x128xf32, #tpu.memory_space<vmem>>, vector<2x128xf32>
    tpu.vector_store %arg5[%c0_46, %c0_47], %160 {strides = array<i32>} : memref<2x128xf32, #tpu.memory_space<vmem>>, vector<2x128xf32>,
    return
  }
}

</mosaic_0001>

<llo_original>
// kernel: tpu_custom_call.1
$region0: #{tpu_custom_call.1}
  #allocation0 [shape = 'u32[]', space=smem, size = 0x4, offset = 0x4, fixed_abs, tag = 'smem constant byte address 0x4 - core index']
  #allocation1 [shape = 'u32[144,128]{1,0:T(1,128)}', space=vmem, size = 0x12000, scoped, tag = 'internal scratch']
  %s0 = inlined_call_operand.vmem [shape: f32[2,300], index: 0, kind: input, shape index: {}]
  %s1 = inlined_call_operand.vmem [shape: f32[300,32], index: 1, kind: input, shape index: {}]
  %s2 = inlined_call_operand.vmem [shape: f32[1,32], index: 2, kind: input, shape index: {}]
  %s3 = inlined_call_operand.vmem [shape: f32[32,8], index: 3, kind: input, shape index: {}]
  %s4 = inlined_call_operand.vmem [shape: f32[1,8], index: 4, kind: input, shape index: {}]
  %s5 = inlined_call_operand.hbm [shape: f32[2,128], index: 5, kind: output, shape index: {}]
  %s6 = sld [smem:[#allocation0]]
  $region30: #{tpu_custom_call.1} parent=0
    _
  %s8 = ssub.s32 1, %s6
  %s9 = scalar_select 0, %s8, %s6
  $region1: #{tpu_custom_call.1} parent=0
    #allocation2 [shape = 'u8[1024]{0}', space=vmem, size = 0x400, scoped, tag = 'output window, operand 0, single buffered']
    #allocation3 [shape = 's32[1]{0}', space=sflag, size = 0x4, scoped, tag = 'scoped memory for tpu_custom_call.1']
    %10 = vsyncpa [#allocation3], 0
    // Predicated region
    $region2: #{tpu_custom_call.1} parent=1 // pred_check
      _
    $region3: #{tpu_custom_call.1} parent=1 // pred_check_branch
      %12 = sbr.rel (0) target = $region5
    $region4: #{tpu_custom_call.1} parent=1 // pred_region
      _
    $region5: #{tpu_custom_call.1} parent=1 // pred_fallthru
      _
    // Predicated region
    $region6: #{tpu_custom_call.1} parent=1 // pred_check
      _
    $region7: #{tpu_custom_call.1} parent=1 // pred_check_branch
      %14 = sbr.rel (0) target = $region9
    $region8: #{tpu_custom_call.1} parent=1 // pred_region
      _
    $region9: #{tpu_custom_call.1} parent=1 // pred_fallthru
      _
    // Predicated region
    $region10: #{tpu_custom_call.1} parent=1 // pred_check
      _
    $region11: #{tpu_custom_call.1} parent=1 // pred_check_branch
      %16 = sbr.rel (0) target = $region13
    $region12: #{tpu_custom_call.1} parent=1 // pred_region
      _
    $region13: #{tpu_custom_call.1} parent=1 // pred_fallthru
      _
    // Predicated region
    $region14: #{tpu_custom_call.1} parent=1 // pred_check
      _
    $region15: #{tpu_custom_call.1} parent=1 // pred_check_branch
      %18 = sbr.rel (0) target = $region17
    $region16: #{tpu_custom_call.1} parent=1 // pred_region
      _
    $region17: #{tpu_custom_call.1} parent=1 // pred_fallthru
      _
    // Predicated region
    $region18: #{tpu_custom_call.1} parent=1 // pred_check
      _
    $region19: #{tpu_custom_call.1} parent=1 // pred_check_branch
      %20 = sbr.rel (0) target = $region21
    $region20: #{tpu_custom_call.1} parent=1 // pred_region
      _
    $region21: #{tpu_custom_call.1} parent=1 // pred_fallthru
      _
    %v21 = vld [vmem:[%s0] sm:$0x3f]
    %v22 = vld [vmem:[%s1] sm:$0xff]
    %v23 = vld [vmem:[%s1 + $0x8] sm:$0xff]
    %v24 = vld [vmem:[%s1 + $0x10] sm:$0xff]
    %v25 = vld [vmem:[%s1 + $0x18] sm:$0xff]
    %v26 = vld [vmem:[%s1 + $0x20] sm:$0xff]
    %v27 = vld [vmem:[%s1 + $0x28] sm:$0xff]
    %v28 = vld [vmem:[%s1 + $0x30] sm:$0xff]
    %v29 = vld [vmem:[%s1 + $0x38] sm:$0xff]
    %v30 = vld [vmem:[%s1 + $0x40] sm:$0xff]
    %v31 = vld [vmem:[%s1 + $0x48] sm:$0xff]
    %v32 = vld [vmem:[%s1 + $0x50] sm:$0xff]
    %v33 = vld [vmem:[%s1 + $0x58] sm:$0xff]
    %v34 = vld [vmem:[%s1 + $0x60] sm:$0xff]
    %v35 = vld [vmem:[%s1 + $0x68] sm:$0xff]
    %v36 = vld [vmem:[%s1 + $0x70] sm:$0xff]
    %v37 = vld [vmem:[%s1 + $0x78] sm:$0xff]
    %v38 = vld [vmem:[%s1 + $0x80] sm:$0xff]
    %v39 = vld [vmem:[%s1 + $0x88] sm:$0xff]
    %v40 = vld [vmem:[%s1 + $0x90] sm:$0xff]
    %v41 = vld [vmem:[%s1 + $0x98] sm:$0xff]
    %v42 = vld [vmem:[%s1 + $0xa0] sm:$0xff]
    %v43 = vld [vmem:[%s1 + $0xa8] sm:$0xff]
    %v44 = vld [vmem:[%s1 + $0xb0] sm:$0xff]
    %v45 = vld [vmem:[%s1 + $0xb8] sm:$0xff]
    %v46 = vld [vmem:[%s1 + $0xc0] sm:$0xff]
    %v47 = vld [vmem:[%s1 + $0xc8] sm:$0xff]
    %v48 = vld [vmem:[%s1 + $0xd0] sm:$0xff]
    %v49 = vld [vmem:[%s1 + $0xd8] sm:$0xff]
    %v50 = vld [vmem:[%s1 + $0xe0] sm:$0xff]
    %v51 = vld [vmem:[%s1 + $0xe8] sm:$0xff]
    %v52 = vld [vmem:[%s1 + $0xf0] sm:$0xff]
    %v53 = vld [vmem:[%s1 + $0xf8] sm:$0xff]
    %v54 = vld [vmem:[%s1 + $0x100] sm:$0xff]
    %v55 = vld [vmem:[%s1 + $0x108] sm:$0xff]
    %v56 = vld [vmem:[%s1 + $0x110] sm:$0xff]
    %v57 = vld [vmem:[%s1 + $0x118] sm:$0xff]
    %v58 = vld [vmem:[%s1 + $0x120] sm:$0xff]
    %v59 = vld [vmem:[%s1 + $0x128] sm:$0xf]
    %v60 = vld [vmem:[%s2] sm:$0x1]
    %v62 = vlaneseq
    %v63 = vshrl.u32 %v62, 7
    %v64 = vsub.s32 0, %v63
    %v65 = vrot.slane %v60, %v64
    %v68 = vcombine.high %v21, %v21
    %v70 = vunpack.c.l.s4 1983009808
    %v71 = vunpack.c.0.s8 %v70
    %v72 = vlaneseq
    %v73 = vshrl.u32 %v72, 7
    %v74 = vsub.s32 %v71, %v73
    %v75 = vrot.slane %v21, %v74
    %v77 = vunpack.c.l.s4 1983009808
    %v78 = vunpack.c.0.s8 %v77
    %v79 = vlaneseq
    %v80 = vshrl.u32 %v79, 7
    %v81 = vsub.s32 %v78, %v80
    %v82 = vrot.slane %v68, %v81
    %v83 = vcombine.high %v75, %v75
    %vm86 = vcmask 359424
    %v87 = vsel %vm86, %v82, 0
    %vm89 = vcmask 1043456
    %v91 = vsel %vm89, %v59, 0
    %93 = vmatprep.subr.mxu0 0.0
    %v94 = vand.u32 %v22, 4294901760
    %95 = vmatpush1.msra.mxu0 %v94
    %96 = vmatprep.subr.mxu0 0.0
    %v97 = vand.u32 %v23, 4294901760
    %98 = vmatpush1.msra.mxu0 %v97
    %99 = vmatprep.subr.mxu0 0.0
    %v100 = vand.u32 %v24, 4294901760
    %101 = vmatpush1.msra.mxu0 %v100
    %102 = vmatprep.subr.mxu0 0.0
    %v103 = vand.u32 %v25, 4294901760
    %104 = vmatpush1.msra.mxu0 %v103
    %105 = vmatprep.subr.mxu0 0.0
    %v106 = vand.u32 %v26, 4294901760
    %107 = vmatpush1.msra.mxu0 %v106
    %108 = vmatprep.subr.mxu0 0.0
    %v109 = vand.u32 %v27, 4294901760
    %110 = vmatpush1.msra.mxu0 %v109
    %111 = vmatprep.subr.mxu0 0.0
    %v112 = vand.u32 %v28, 4294901760
    %113 = vmatpush1.msra.mxu0 %v112
    %114 = vmatprep.subr.mxu0 0.0
    %v115 = vand.u32 %v29, 4294901760
    %116 = vmatpush1.msra.mxu0 %v115
    %117 = vmatprep.subr.mxu0 0.0
    %v118 = vand.u32 %v30, 4294901760
    %119 = vmatpush1.msra.mxu0 %v118
    %120 = vmatprep.subr.mxu0 0.0
    %v121 = vand.u32 %v31, 4294901760
    %122 = vmatpush1.msra.mxu0 %v121
    %123 = vmatprep.subr.mxu0 0.0
    %v124 = vand.u32 %v32, 4294901760
    %125 = vmatpush1.msra.mxu0 %v124
    %126 = vmatprep.subr.mxu0 0.0
    %v127 = vand.u32 %v33, 4294901760
    %128 = vmatpush1.msra.mxu0 %v127
    %129 = vmatprep.subr.mxu0 0.0
    %v130 = vand.u32 %v34, 4294901760
    %131 = vmatpush1.msra.mxu0 %v130
    %132 = vmatprep.subr.mxu0 0.0
    %v133 = vand.u32 %v35, 4294901760
    %134 = vmatpush1.msra.mxu0 %v133
    %135 = vmatprep.subr.mxu0 0.0
    %v136 = vand.u32 %v36, 4294901760
    %137 = vmatpush1.msra.mxu0 %v136
    %138 = vmatprep.subr.mxu0 0.0
    %v139 = vand.u32 %v37, 4294901760
    %140 = vmatpush1.msra.mxu0 %v139
    %141 = vmatprep.subr.mxu0 0.0
    %v142 = vand.u32 %v38, 4294901760
    %143 = vmatpush1.msra.mxu0 %v142
    %144 = vmatprep.subr.mxu0 0.0
    %v145 = vand.u32 %v39, 4294901760
    %146 = vmatpush1.msra.mxu0 %v145
    %147 = vmatprep.subr.mxu0 0.0
    %v148 = vand.u32 %v40, 4294901760
    %149 = vmatpush1.msra.mxu0 %v148
    %150 = vmatprep.subr.mxu0 0.0
    %v151 = vand.u32 %v41, 4294901760
    %152 = vmatpush1.msra.mxu0 %v151
    %153 = vmatprep.subr.mxu0 0.0
    %v154 = vand.u32 %v42, 4294901760
    %155 = vmatpush1.msra.mxu0 %v154
    %156 = vmatprep.subr.mxu0 0.0
    %v157 = vand.u32 %v43, 4294901760
    %158 = vmatpush1.msra.mxu0 %v157
    %159 = vmatprep.subr.mxu0 0.0
    %v160 = vand.u32 %v44, 4294901760
    %161 = vmatpush1.msra.mxu0 %v160
    %162 = vmatprep.subr.mxu0 0.0
    %v163 = vand.u32 %v45, 4294901760
    %164 = vmatpush1.msra.mxu0 %v163
    %165 = vmatprep.subr.mxu0 0.0
    %v166 = vand.u32 %v46, 4294901760
    %167 = vmatpush1.msra.mxu0 %v166
    %168 = vmatprep.subr.mxu0 0.0
    %v169 = vand.u32 %v47, 4294901760
    %170 = vmatpush1.msra.mxu0 %v169
    %171 = vmatprep.subr.mxu0 0.0
    %v172 = vand.u32 %v48, 4294901760
    %173 = vmatpush1.msra.mxu0 %v172
    %174 = vmatprep.subr.mxu0 0.0
    %v175 = vand.u32 %v49, 4294901760
    %176 = vmatpush1.msra.mxu0 %v175
    %177 = vmatprep.subr.mxu0 0.0
    %v178 = vand.u32 %v50, 4294901760
    %179 = vmatpush1.msra.mxu0 %v178
    %180 = vmatprep.subr.mxu0 0.0
    %v181 = vand.u32 %v51, 4294901760
    %182 = vmatpush1.msra.mxu0 %v181
    %183 = vmatprep.subr.mxu0 0.0
    %v184 = vand.u32 %v52, 4294901760
    %185 = vmatpush1.msra.mxu0 %v184
    %186 = vmatprep.subr.mxu0 0.0
    %v187 = vand.u32 %v53, 4294901760
    %188 = vmatpush1.msra.mxu0 %v187
    %v189 = vand.u32 %v83, 4294901760
    %v190 = vsub.f32 %v83, %v189
    %v191 = vand.u32 %v190, 4294901760
    %v192 = vsub.f32 %v190, %v191
    %v193 = vand.u32 %v192, 4294901760
    %194 = vmatprep.mubr.f32.mxu0 %v193
    %v195 = vand.u32 %v75, 4294901760
    %v196 = vsub.f32 %v75, %v195
    %v197 = vand.u32 %v196, 4294901760
    %v198 = vsub.f32 %v196, %v197
    %v199 = vand.u32 %v198, 4294901760
    %200 = vmatmul.mubr.f32.gmra.mrb[0].mxu0 %v199
    %v201 = vpop.f32.mrb[0].mxu0
    %v202 = vadd.f32 %v65, %v201
    %v203 = vpop.f32.mrb[0].mxu0
    %204 = vdwg.mxu0
    %205 = vmatprep.subr.mxu0 0.0
    %v206 = vand.u32 %v22, 4294901760
    %v207 = vsub.f32 %v22, %v206
    %v208 = vand.u32 %v207, 4294901760
    %v209 = vsub.f32 %v207, %v208
    %v210 = vand.u32 %v209, 4294901760
    %211 = vmatpush1.msra.mxu0 %v210
    %212 = vmatprep.subr.mxu0 0.0
    %v213 = vand.u32 %v23, 4294901760
    %v214 = vsub.f32 %v23, %v213
    %v215 = vand.u32 %v214, 4294901760
    %v216 = vsub.f32 %v214, %v215
    %v217 = vand.u32 %v216, 4294901760
    %218 = vmatpush1.msra.mxu0 %v217
    %219 = vmatprep.subr.mxu0 0.0
    %v220 = vand.u32 %v24, 4294901760
    %v221 = vsub.f32 %v24, %v220
    %v222 = vand.u32 %v221, 4294901760
    %v223 = vsub.f32 %v221, %v222
    %v224 = vand.u32 %v223, 4294901760
    %225 = vmatpush1.msra.mxu0 %v224
    %226 = vmatprep.subr.mxu0 0.0
    %v227 = vand.u32 %v25, 4294901760
    %v228 = vsub.f32 %v25, %v227
    %v229 = vand.u32 %v228, 4294901760
    %v230 = vsub.f32 %v228, %v229
    %v231 = vand.u32 %v230, 4294901760
    %232 = vmatpush1.msra.mxu0 %v231
    %233 = vmatprep.subr.mxu0 0.0
    %v234 = vand.u32 %v26, 4294901760
    %v235 = vsub.f32 %v26, %v234
    %v236 = vand.u32 %v235, 4294901760
    %v237 = vsub.f32 %v235, %v236
    %v238 = vand.u32 %v237, 4294901760
    %239 = vmatpush1.msra.mxu0 %v238
    %240 = vmatprep.subr.mxu0 0.0
    %v241 = vand.u32 %v27, 4294901760
    %v242 = vsub.f32 %v27, %v241
    %v243 = vand.u32 %v242, 4294901760
    %v244 = vsub.f32 %v242, %v243
    %v245 = vand.u32 %v244, 4294901760
    %246 = vmatpush1.msra.mxu0 %v245
    %247 = vmatprep.subr.mxu0 0.0
    %v248 = vand.u32 %v28, 4294901760
    %v249 = vsub.f32 %v28, %v248
    %v250 = vand.u32 %v249, 4294901760
    %v251 = vsub.f32 %v249, %v250
    %v252 = vand.u32 %v251, 4294901760
    %253 = vmatpush1.msra.mxu0 %v252
    %254 = vmatprep.subr.mxu0 0.0
    %v255 = vand.u32 %v29, 4294901760
    %v256 = vsub.f32 %v29, %v255
    %v257 = vand.u32 %v256, 4294901760
    %v258 = vsub.f32 %v256, %v257
    %v259 = vand.u32 %v258, 4294901760
    %260 = vmatpush1.msra.mxu0 %v259
    %261 = vmatprep.subr.mxu0 0.0
    %v262 = vand.u32 %v30, 4294901760
    %v263 = vsub.f32 %v30, %v262
    %v264 = vand.u32 %v263, 4294901760
    %v265 = vsub.f32 %v263, %v264
    %v266 = vand.u32 %v265, 4294901760
    %267 = vmatpush1.msra.mxu0 %v266
    %268 = vmatprep.subr.mxu0 0.0
    %v269 = vand.u32 %v31, 4294901760
    %v270 = vsub.f32 %v31, %v269
    %v271 = vand.u32 %v270, 4294901760
    %v272 = vsub.f32 %v270, %v271
    %v273 = vand.u32 %v272, 4294901760
    %274 = vmatpush1.msra.mxu0 %v273
    %275 = vmatprep.subr.mxu0 0.0
    %v276 = vand.u32 %v32, 4294901760
    %v277 = vsub.f32 %v32, %v276
    %v278 = vand.u32 %v277, 4294901760
    %v279 = vsub.f32 %v277, %v278
    %v280 = vand.u32 %v279, 4294901760
    %281 = vmatpush1.msra.mxu0 %v280
    %282 = vmatprep.subr.mxu0 0.0
    %v283 = vand.u32 %v33, 4294901760
    %v284 = vsub.f32 %v33, %v283
    %v285 = vand.u32 %v284, 4294901760
    %v286 = vsub.f32 %v284, %v285
    %v287 = vand.u32 %v286, 4294901760
    %288 = vmatpush1.msra.mxu0 %v287
    %289 = vmatprep.subr.mxu0 0.0
    %v290 = vand.u32 %v34, 4294901760
    %v291 = vsub.f32 %v34, %v290
    %v292 = vand.u32 %v291, 4294901760
    %v293 = vsub.f32 %v291, %v292
    %v294 = vand.u32 %v293, 4294901760
    %295 = vmatpush1.msra.mxu0 %v294
    %296 = vmatprep.subr.mxu0 0.0
    %v297 = vand.u32 %v35, 4294901760
    %v298 = vsub.f32 %v35, %v297
    %v299 = vand.u32 %v298, 4294901760
    %v300 = vsub.f32 %v298, %v299
    %v301 = vand.u32 %v300, 4294901760
    %302 = vmatpush1.msra.mxu0 %v301
    %303 = vmatprep.subr.mxu0 0.0
    %v304 = vand.u32 %v36, 4294901760
    %v305 = vsub.f32 %v36, %v304
    %v306 = vand.u32 %v305, 4294901760
    %v307 = vsub.f32 %v305, %v306
    %v308 = vand.u32 %v307, 4294901760
    %309 = vmatpush1.msra.mxu0 %v308
    %310 = vmatprep.subr.mxu0 0.0
    %v311 = vand.u32 %v37, 4294901760
    %v312 = vsub.f32 %v37, %v311
    %v313 = vand.u32 %v312, 4294901760
    %v314 = vsub.f32 %v312, %v313
    %v315 = vand.u32 %v314, 4294901760
    %316 = vmatpush1.msra.mxu0 %v315
    %317 = vmatprep.subr.mxu0 0.0
    %v318 = vand.u32 %v38, 4294901760
    %v319 = vsub.f32 %v38, %v318
    %v320 = vand.u32 %v319, 4294901760
    %v321 = vsub.f32 %v319, %v320
    %v322 = vand.u32 %v321, 4294901760
    %323 = vmatpush1.msra.mxu0 %v322
    %324 = vmatprep.subr.mxu0 0.0
    %v325 = vand.u32 %v39, 4294901760
    %v326 = vsub.f32 %v39, %v325
    %v327 = vand.u32 %v326, 4294901760
    %v328 = vsub.f32 %v326, %v327
    %v329 = vand.u32 %v328, 4294901760
    %330 = vmatpush1.msra.mxu0 %v329
    %331 = vmatprep.subr.mxu0 0.0
    %v332 = vand.u32 %v40, 4294901760
    %v333 = vsub.f32 %v40, %v332
    %v334 = vand.u32 %v333, 4294901760
    %v335 = vsub.f32 %v333, %v334
    %v336 = vand.u32 %v335, 4294901760
    %337 = vmatpush1.msra.mxu0 %v336
    %338 = vmatprep.subr.mxu0 0.0
    %v339 = vand.u32 %v41, 4294901760
    %v340 = vsub.f32 %v41, %v339
    %v341 = vand.u32 %v340, 4294901760
    %v342 = vsub.f32 %v340, %v341
    %v343 = vand.u32 %v342, 4294901760
    %344 = vmatpush1.msra.mxu0 %v343
    %345 = vmatprep.subr.mxu0 0.0
    %v346 = vand.u32 %v42, 4294901760
    %v347 = vsub.f32 %v42, %v346
    %v348 = vand.u32 %v347, 4294901760
    %v349 = vsub.f32 %v347, %v348
    %v350 = vand.u32 %v349, 4294901760
    %351 = vmatpush1.msra.mxu0 %v350
    %352 = vmatprep.subr.mxu0 0.0
    %v353 = vand.u32 %v43, 4294901760
    %v354 = vsub.f32 %v43, %v353
    %v355 = vand.u32 %v354, 4294901760
    %v356 = vsub.f32 %v354, %v355
    %v357 = vand.u32 %v356, 4294901760
    %358 = vmatpush1.msra.mxu0 %v357
    %359 = vmatprep.subr.mxu0 0.0
    %v360 = vand.u32 %v44, 4294901760
    %v361 = vsub.f32 %v44, %v360
    %v362 = vand.u32 %v361, 4294901760
    %v363 = vsub.f32 %v361, %v362
    %v364 = vand.u32 %v363, 4294901760
    %365 = vmatpush1.msra.mxu0 %v364
    %366 = vmatprep.subr.mxu0 0.0
    %v367 = vand.u32 %v45, 4294901760
    %v368 = vsub.f32 %v45, %v367
    %v369 = vand.u32 %v368, 4294901760
    %v370 = vsub.f32 %v368, %v369
    %v371 = vand.u32 %v370, 4294901760
    %372 = vmatpush1.msra.mxu0 %v371
    %373 = vmatprep.subr.mxu0 0.0
    %v374 = vand.u32 %v46, 4294901760
    %v375 = vsub.f32 %v46, %v374
    %v376 = vand.u32 %v375, 4294901760
    %v377 = vsub.f32 %v375, %v376
    %v378 = vand.u32 %v377, 4294901760
    %379 = vmatpush1.msra.mxu0 %v378
    %380 = vmatprep.subr.mxu0 0.0
    %v381 = vand.u32 %v47, 4294901760
    %v382 = vsub.f32 %v47, %v381
    %v383 = vand.u32 %v382, 4294901760
    %v384 = vsub.f32 %v382, %v383
    %v385 = vand.u32 %v384, 4294901760
    %386 = vmatpush1.msra.mxu0 %v385
    %387 = vmatprep.subr.mxu0 0.0
    %v388 = vand.u32 %v48, 4294901760
    %v389 = vsub.f32 %v48, %v388
    %v390 = vand.u32 %v389, 4294901760
    %v391 = vsub.f32 %v389, %v390
    %v392 = vand.u32 %v391, 4294901760
    %393 = vmatpush1.msra.mxu0 %v392
    %394 = vmatprep.subr.mxu0 0.0
    %v395 = vand.u32 %v49, 4294901760
    %v396 = vsub.f32 %v49, %v395
    %v397 = vand.u32 %v396, 4294901760
    %v398 = vsub.f32 %v396, %v397
    %v399 = vand.u32 %v398, 4294901760
    %400 = vmatpush1.msra.mxu0 %v399
    %401 = vmatprep.subr.mxu0 0.0
    %v402 = vand.u32 %v50, 4294901760
    %v403 = vsub.f32 %v50, %v402
    %v404 = vand.u32 %v403, 4294901760
    %v405 = vsub.f32 %v403, %v404
    %v406 = vand.u32 %v405, 4294901760
    %407 = vmatpush1.msra.mxu0 %v406
    %408 = vmatprep.subr.mxu0 0.0
    %v409 = vand.u32 %v51, 4294901760
    %v410 = vsub.f32 %v51, %v409
    %v411 = vand.u32 %v410, 4294901760
    %v412 = vsub.f32 %v410, %v411
    %v413 = vand.u32 %v412, 4294901760
    %414 = vmatpush1.msra.mxu0 %v413
    %415 = vmatprep.subr.mxu0 0.0
    %v416 = vand.u32 %v52, 4294901760
    %v417 = vsub.f32 %v52, %v416
    %v418 = vand.u32 %v417, 4294901760
    %v419 = vsub.f32 %v417, %v418
    %v420 = vand.u32 %v419, 4294901760
    %421 = vmatpush1.msra.mxu0 %v420
    %422 = vmatprep.subr.mxu0 0.0
    %v423 = vand.u32 %v53, 4294901760
    %v424 = vsub.f32 %v53, %v423
    %v425 = vand.u32 %v424, 4294901760
    %v426 = vsub.f32 %v424, %v425
    %v427 = vand.u32 %v426, 4294901760
    %428 = vmatpush1.msra.mxu0 %v427
    %v429 = vand.u32 %v83, 4294901760
    %430 = vmatprep.mubr.f32.mxu0 %v429
    %v431 = vand.u32 %v75, 4294901760
    %432 = vmatmul.mubr.f32.gmra.mrb[0].mxu0 %v431
    %v433 = vpop.f32.mrb[0].mxu0
    %v434 = vadd.f32 %v202, %v433
    %v435 = vpop.f32.mrb[0].mxu0
    %436 = vdwg.mxu0
    %437 = vmatprep.subr.mxu0 0.0
    %v438 = vand.u32 %v22, 4294901760
    %v439 = vsub.f32 %v22, %v438
    %440 = vmatpush1.msra.mxu0 %v439
    %441 = vmatprep.subr.mxu0 0.0
    %v442 = vand.u32 %v23, 4294901760
    %v443 = vsub.f32 %v23, %v442
    %444 = vmatpush1.msra.mxu0 %v443
    %445 = vmatprep.subr.mxu0 0.0
    %v446 = vand.u32 %v24, 4294901760
    %v447 = vsub.f32 %v24, %v446
    %448 = vmatpush1.msra.mxu0 %v447
    %449 = vmatprep.subr.mxu0 0.0
    %v450 = vand.u32 %v25, 4294901760
    %v451 = vsub.f32 %v25, %v450
    %452 = vmatpush1.msra.mxu0 %v451
    %453 = vmatprep.subr.mxu0 0.0
    %v454 = vand.u32 %v26, 4294901760
    %v455 = vsub.f32 %v26, %v454
    %456 = vmatpush1.msra.mxu0 %v455
    %457 = vmatprep.subr.mxu0 0.0
    %v458 = vand.u32 %v27, 4294901760
    %v459 = vsub.f32 %v27, %v458
    %460 = vmatpush1.msra.mxu0 %v459
    %461 = vmatprep.subr.mxu0 0.0
    %v462 = vand.u32 %v28, 4294901760
    %v463 = vsub.f32 %v28, %v462
    %464 = vmatpush1.msra.mxu0 %v463
    %465 = vmatprep.subr.mxu0 0.0
    %v466 = vand.u32 %v29, 4294901760
    %v467 = vsub.f32 %v29, %v466
    %468 = vmatpush1.msra.mxu0 %v467
    %469 = vmatprep.subr.mxu0 0.0
    %v470 = vand.u32 %v30, 4294901760
    %v471 = vsub.f32 %v30, %v470
    %472 = vmatpush1.msra.mxu0 %v471
    %473 = vmatprep.subr.mxu0 0.0
    %v474 = vand.u32 %v31, 4294901760
    %v475 = vsub.f32 %v31, %v474
    %476 = vmatpush1.msra.mxu0 %v475
    %477 = vmatprep.subr.mxu0 0.0
    %v478 = vand.u32 %v32, 4294901760
    %v479 = vsub.f32 %v32, %v478
    %480 = vmatpush1.msra.mxu0 %v479
    %481 = vmatprep.subr.mxu0 0.0
    %v482 = vand.u32 %v33, 4294901760
    %v483 = vsub.f32 %v33, %v482
    %484 = vmatpush1.msra.mxu0 %v483
    %485 = vmatprep.subr.mxu0 0.0
    %v486 = vand.u32 %v34, 4294901760
    %v487 = vsub.f32 %v34, %v486
    %488 = vmatpush1.msra.mxu0 %v487
    %489 = vmatprep.subr.mxu0 0.0
    %v490 = vand.u32 %v35, 4294901760
    %v491 = vsub.f32 %v35, %v490
    %492 = vmatpush1.msra.mxu0 %v491
    %493 = vmatprep.subr.mxu0 0.0
    %v494 = vand.u32 %v36, 4294901760
    %v495 = vsub.f32 %v36, %v494
    %496 = vmatpush1.msra.mxu0 %v495
    %497 = vmatprep.subr.mxu0 0.0
    %v498 = vand.u32 %v37, 4294901760
    %v499 = vsub.f32 %v37, %v498
    %500 = vmatpush1.msra.mxu0 %v499
    %501 = vmatprep.subr.mxu0 0.0
    %v502 = vand.u32 %v38, 4294901760
    %v503 = vsub.f32 %v38, %v502
    %504 = vmatpush1.msra.mxu0 %v503
    %505 = vmatprep.subr.mxu0 0.0
    %v506 = vand.u32 %v39, 4294901760
    %v507 = vsub.f32 %v39, %v506
    %508 = vmatpush1.msra.mxu0 %v507
    %509 = vmatprep.subr.mxu0 0.0
    %v510 = vand.u32 %v40, 4294901760
    %v511 = vsub.f32 %v40, %v510
    %512 = vmatpush1.msra.mxu0 %v511
    %513 = vmatprep.subr.mxu0 0.0
    %v514 = vand.u32 %v41, 4294901760
    %v515 = vsub.f32 %v41, %v514
    %516 = vmatpush1.msra.mxu0 %v515
    %517 = vmatprep.subr.mxu0 0.0
    %v518 = vand.u32 %v42, 4294901760
    %v519 = vsub.f32 %v42, %v518
    %520 = vmatpush1.msra.mxu0 %v519
    %521 = vmatprep.subr.mxu0 0.0
    %v522 = vand.u32 %v43, 4294901760
    %v523 = vsub.f32 %v43, %v522
    %524 = vmatpush1.msra.mxu0 %v523
    %525 = vmatprep.subr.mxu0 0.0
    %v526 = vand.u32 %v44, 4294901760
    %v527 = vsub.f32 %v44, %v526
    %528 = vmatpush1.msra.mxu0 %v527
    %529 = vmatprep.subr.mxu0 0.0
    %v530 = vand.u32 %v45, 4294901760
    %v531 = vsub.f32 %v45, %v530
    %532 = vmatpush1.msra.mxu0 %v531
    %533 = vmatprep.subr.mxu0 0.0
    %v534 = vand.u32 %v46, 4294901760
    %v535 = vsub.f32 %v46, %v534
    %536 = vmatpush1.msra.mxu0 %v535
    %537 = vmatprep.subr.mxu0 0.0
    %v538 = vand.u32 %v47, 4294901760
    %v539 = vsub.f32 %v47, %v538
    %540 = vmatpush1.msra.mxu0 %v539
    %541 = vmatprep.subr.mxu0 0.0
    %v542 = vand.u32 %v48, 4294901760
    %v543 = vsub.f32 %v48, %v542
    %544 = vmatpush1.msra.mxu0 %v543
    %545 = vmatprep.subr.mxu0 0.0
    %v546 = vand.u32 %v49, 4294901760
    %v547 = vsub.f32 %v49, %v546
    %548 = vmatpush1.msra.mxu0 %v547
    %549 = vmatprep.subr.mxu0 0.0
    %v550 = vand.u32 %v50, 4294901760
    %v551 = vsub.f32 %v50, %v550
    %552 = vmatpush1.msra.mxu0 %v551
    %553 = vmatprep.subr.mxu0 0.0
    %v554 = vand.u32 %v51, 4294901760
    %v555 = vsub.f32 %v51, %v554
    %556 = vmatpush1.msra.mxu0 %v555
    %557 = vmatprep.subr.mxu0 0.0
    %v558 = vand.u32 %v52, 4294901760
    %v559 = vsub.f32 %v52, %v558
    %560 = vmatpush1.msra.mxu0 %v559
    %561 = vmatprep.subr.mxu0 0.0
    %v562 = vand.u32 %v53, 4294901760
    %v563 = vsub.f32 %v53, %v562
    %564 = vmatpush1.msra.mxu0 %v563
    %v565 = vand.u32 %v83, 4294901760
    %v566 = vsub.f32 %v83, %v565
    %567 = vmatprep.mubr.f32.mxu0 %v566
    %v568 = vand.u32 %v75, 4294901760
    %v569 = vsub.f32 %v75, %v568
    %570 = vmatmul.mubr.f32.gmra.mrb[0].mxu0 %v569
    %v571 = vpop.f32.mrb[0].mxu0
    %v572 = vadd.f32 %v434, %v571
    %v573 = vpop.f32.mrb[0].mxu0
    %574 = vdwg.mxu0
    %575 = vmatprep.subr.mxu0 0.0
    %v576 = vand.u32 %v22, 4294901760
    %577 = vmatpush1.msra.mxu0 %v576
    %578 = vmatprep.subr.mxu0 0.0
    %v579 = vand.u32 %v23, 4294901760
    %580 = vmatpush1.msra.mxu0 %v579
    %581 = vmatprep.subr.mxu0 0.0
    %v582 = vand.u32 %v24, 4294901760
    %583 = vmatpush1.msra.mxu0 %v582
    %584 = vmatprep.subr.mxu0 0.0
    %v585 = vand.u32 %v25, 4294901760
    %586 = vmatpush1.msra.mxu0 %v585
    %587 = vmatprep.subr.mxu0 0.0
    %v588 = vand.u32 %v26, 4294901760
    %589 = vmatpush1.msra.mxu0 %v588
    %590 = vmatprep.subr.mxu0 0.0
    %v591 = vand.u32 %v27, 4294901760
    %592 = vmatpush1.msra.mxu0 %v591
    %593 = vmatprep.subr.mxu0 0.0
    %v594 = vand.u32 %v28, 4294901760
    %595 = vmatpush1.msra.mxu0 %v594
    %596 = vmatprep.subr.mxu0 0.0
    %v597 = vand.u32 %v29, 4294901760
    %598 = vmatpush1.msra.mxu0 %v597
    %599 = vmatprep.subr.mxu0 0.0
    %v600 = vand.u32 %v30, 4294901760
    %601 = vmatpush1.msra.mxu0 %v600
    %602 = vmatprep.subr.mxu0 0.0
    %v603 = vand.u32 %v31, 4294901760
    %604 = vmatpush1.msra.mxu0 %v603
    %605 = vmatprep.subr.mxu0 0.0
    %v606 = vand.u32 %v32, 4294901760
    %607 = vmatpush1.msra.mxu0 %v606
    %608 = vmatprep.subr.mxu0 0.0
    %v609 = vand.u32 %v33, 4294901760
    %610 = vmatpush1.msra.mxu0 %v609
    %611 = vmatprep.subr.mxu0 0.0
    %v612 = vand.u32 %v34, 4294901760
    %613 = vmatpush1.msra.mxu0 %v612
    %614 = vmatprep.subr.mxu0 0.0
    %v615 = vand.u32 %v35, 4294901760
    %616 = vmatpush1.msra.mxu0 %v615
    %617 = vmatprep.subr.mxu0 0.0
    %v618 = vand.u32 %v36, 4294901760
    %619 = vmatpush1.msra.mxu0 %v618
    %620 = vmatprep.subr.mxu0 0.0
    %v621 = vand.u32 %v37, 4294901760
    %622 = vmatpush1.msra.mxu0 %v621
    %623 = vmatprep.subr.mxu0 0.0
    %v624 = vand.u32 %v38, 4294901760
    %625 = vmatpush1.msra.mxu0 %v624
    %626 = vmatprep.subr.mxu0 0.0
    %v627 = vand.u32 %v39, 4294901760
    %628 = vmatpush1.msra.mxu0 %v627
    %629 = vmatprep.subr.mxu0 0.0
    %v630 = vand.u32 %v40, 4294901760
    %631 = vmatpush1.msra.mxu0 %v630
    %632 = vmatprep.subr.mxu0 0.0
    %v633 = vand.u32 %v41, 4294901760
    %634 = vmatpush1.msra.mxu0 %v633
    %635 = vmatprep.subr.mxu0 0.0
    %v636 = vand.u32 %v42, 4294901760
    %637 = vmatpush1.msra.mxu0 %v636
    %638 = vmatprep.subr.mxu0 0.0
    %v639 = vand.u32 %v43, 4294901760
    %640 = vmatpush1.msra.mxu0 %v639
    %641 = vmatprep.subr.mxu0 0.0
    %v642 = vand.u32 %v44, 4294901760
    %643 = vmatpush1.msra.mxu0 %v642
    %644 = vmatprep.subr.mxu0 0.0
    %v645 = vand.u32 %v45, 4294901760
    %646 = vmatpush1.msra.mxu0 %v645
    %647 = vmatprep.subr.mxu0 0.0
    %v648 = vand.u32 %v46, 4294901760
    %649 = vmatpush1.msra.mxu0 %v648
    %650 = vmatprep.subr.mxu0 0.0
    %v651 = vand.u32 %v47, 4294901760
    %652 = vmatpush1.msra.mxu0 %v651
    %653 = vmatprep.subr.mxu0 0.0
    %v654 = vand.u32 %v48, 4294901760
    %655 = vmatpush1.msra.mxu0 %v654
    %656 = vmatprep.subr.mxu0 0.0
    %v657 = vand.u32 %v49, 4294901760
    %658 = vmatpush1.msra.mxu0 %v657
    %659 = vmatprep.subr.mxu0 0.0
    %v660 = vand.u32 %v50, 4294901760
    %661 = vmatpush1.msra.mxu0 %v660
    %662 = vmatprep.subr.mxu0 0.0
    %v663 = vand.u32 %v51, 4294901760
    %664 = vmatpush1.msra.mxu0 %v663
    %665 = vmatprep.subr.mxu0 0.0
    %v666 = vand.u32 %v52, 4294901760
    %667 = vmatpush1.msra.mxu0 %v666
    %668 = vmatprep.subr.mxu0 0.0
    %v669 = vand.u32 %v53, 4294901760
    %670 = vmatpush1.msra.mxu0 %v669
    %v671 = vand.u32 %v83, 4294901760
    %v672 = vsub.f32 %v83, %v671
    %v673 = vand.u32 %v672, 4294901760
    %674 = vmatprep.mubr.f32.mxu0 %v673
    %v675 = vand.u32 %v75, 4294901760
    %v676 = vsub.f32 %v75, %v675
    %v677 = vand.u32 %v676, 4294901760
    %678 = vmatmul.mubr.f32.gmra.mrb[0].mxu0 %v677
    %v679 = vpop.f32.mrb[0].mxu0
    %v680 = vadd.f32 %v572, %v679
    %v681 = vpop.f32.mrb[0].mxu0
    %682 = vdwg.mxu0
    %683 = vmatprep.subr.mxu0 0.0
    %v684 = vand.u32 %v22, 4294901760
    %v685 = vsub.f32 %v22, %v684
    %v686 = vand.u32 %v685, 4294901760
    %687 = vmatpush1.msra.mxu0 %v686
    %688 = vmatprep.subr.mxu0 0.0
    %v689 = vand.u32 %v23, 4294901760
    %v690 = vsub.f32 %v23, %v689
    %v691 = vand.u32 %v690, 4294901760
    %692 = vmatpush1.msra.mxu0 %v691
    %693 = vmatprep.subr.mxu0 0.0
    %v694 = vand.u32 %v24, 4294901760
    %v695 = vsub.f32 %v24, %v694
    %v696 = vand.u32 %v695, 4294901760
    %697 = vmatpush1.msra.mxu0 %v696
    %698 = vmatprep.subr.mxu0 0.0
    %v699 = vand.u32 %v25, 4294901760
    %v700 = vsub.f32 %v25, %v699
    %v701 = vand.u32 %v700, 4294901760
    %702 = vmatpush1.msra.mxu0 %v701
    %703 = vmatprep.subr.mxu0 0.0
    %v704 = vand.u32 %v26, 4294901760
    %v705 = vsub.f32 %v26, %v704
    %v706 = vand.u32 %v705, 4294901760
    %707 = vmatpush1.msra.mxu0 %v706
    %708 = vmatprep.subr.mxu0 0.0
    %v709 = vand.u32 %v27, 4294901760
    %v710 = vsub.f32 %v27, %v709
    %v711 = vand.u32 %v710, 4294901760
    %712 = vmatpush1.msra.mxu0 %v711
    %713 = vmatprep.subr.mxu0 0.0
    %v714 = vand.u32 %v28, 4294901760
    %v715 = vsub.f32 %v28, %v714
    %v716 = vand.u32 %v715, 4294901760
    %717 = vmatpush1.msra.mxu0 %v716
    %718 = vmatprep.subr.mxu0 0.0
    %v719 = vand.u32 %v29, 4294901760
    %v720 = vsub.f32 %v29, %v719
    %v721 = vand.u32 %v720, 4294901760
    %722 = vmatpush1.msra.mxu0 %v721
    %723 = vmatprep.subr.mxu0 0.0
    %v724 = vand.u32 %v30, 4294901760
    %v725 = vsub.f32 %v30, %v724
    %v726 = vand.u32 %v725, 4294901760
    %727 = vmatpush1.msra.mxu0 %v726
    %728 = vmatprep.subr.mxu0 0.0
    %v729 = vand.u32 %v31, 4294901760
    %v730 = vsub.f32 %v31, %v729
    %v731 = vand.u32 %v730, 4294901760
    %732 = vmatpush1.msra.mxu0 %v731
    %733 = vmatprep.subr.mxu0 0.0
    %v734 = vand.u32 %v32, 4294901760
    %v735 = vsub.f32 %v32, %v734
    %v736 = vand.u32 %v735, 4294901760
    %737 = vmatpush1.msra.mxu0 %v736
    %738 = vmatprep.subr.mxu0 0.0
    %v739 = vand.u32 %v33, 4294901760
    %v740 = vsub.f32 %v33, %v739
    %v741 = vand.u32 %v740, 4294901760
    %742 = vmatpush1.msra.mxu0 %v741
    %743 = vmatprep.subr.mxu0 0.0
    %v744 = vand.u32 %v34, 4294901760
    %v745 = vsub.f32 %v34, %v744
    %v746 = vand.u32 %v745, 4294901760
    %747 = vmatpush1.msra.mxu0 %v746
    %748 = vmatprep.subr.mxu0 0.0
    %v749 = vand.u32 %v35, 4294901760
    %v750 = vsub.f32 %v35, %v749
    %v751 = vand.u32 %v750, 4294901760
    %752 = vmatpush1.msra.mxu0 %v751
    %753 = vmatprep.subr.mxu0 0.0
    %v754 = vand.u32 %v36, 4294901760
    %v755 = vsub.f32 %v36, %v754
    %v756 = vand.u32 %v755, 4294901760
    %757 = vmatpush1.msra.mxu0 %v756
    %758 = vmatprep.subr.mxu0 0.0
    %v759 = vand.u32 %v37, 4294901760
    %v760 = vsub.f32 %v37, %v759
    %v761 = vand.u32 %v760, 4294901760
    %762 = vmatpush1.msra.mxu0 %v761
    %763 = vmatprep.subr.mxu0 0.0
    %v764 = vand.u32 %v38, 4294901760
    %v765 = vsub.f32 %v38, %v764
    %v766 = vand.u32 %v765, 4294901760
    %767 = vmatpush1.msra.mxu0 %v766
    %768 = vmatprep.subr.mxu0 0.0
    %v769 = vand.u32 %v39, 4294901760
    %v770 = vsub.f32 %v39, %v769
    %v771 = vand.u32 %v770, 4294901760
    %772 = vmatpush1.msra.mxu0 %v771
    %773 = vmatprep.subr.mxu0 0.0
    %v774 = vand.u32 %v40, 4294901760
    %v775 = vsub.f32 %v40, %v774
    %v776 = vand.u32 %v775, 4294901760
    %777 = vmatpush1.msra.mxu0 %v776
    %778 = vmatprep.subr.mxu0 0.0
    %v779 = vand.u32 %v41, 4294901760
    %v780 = vsub.f32 %v41, %v779
    %v781 = vand.u32 %v780, 4294901760
    %782 = vmatpush1.msra.mxu0 %v781
    %783 = vmatprep.subr.mxu0 0.0
    %v784 = vand.u32 %v42, 4294901760
    %v785 = vsub.f32 %v42, %v784
    %v786 = vand.u32 %v785, 4294901760
    %787 = vmatpush1.msra.mxu0 %v786
    %788 = vmatprep.subr.mxu0 0.0
    %v789 = vand.u32 %v43, 4294901760
    %v790 = vsub.f32 %v43, %v789
    %v791 = vand.u32 %v790, 4294901760
    %792 = vmatpush1.msra.mxu0 %v791
    %793 = vmatprep.subr.mxu0 0.0
    %v794 = vand.u32 %v44, 4294901760
    %v795 = vsub.f32 %v44, %v794
    %v796 = vand.u32 %v795, 4294901760
    %797 = vmatpush1.msra.mxu0 %v796
    %798 = vmatprep.subr.mxu0 0.0
    %v799 = vand.u32 %v45, 4294901760
    %v800 = vsub.f32 %v45, %v799
    %v801 = vand.u32 %v800, 4294901760
    %802 = vmatpush1.msra.mxu0 %v801
    %803 = vmatprep.subr.mxu0 0.0
    %v804 = vand.u32 %v46, 4294901760
    %v805 = vsub.f32 %v46, %v804
    %v806 = vand.u32 %v805, 4294901760
    %807 = vmatpush1.msra.mxu0 %v806
    %808 = vmatprep.subr.mxu0 0.0
    %v809 = vand.u32 %v47, 4294901760
    %v810 = vsub.f32 %v47, %v809
    %v811 = vand.u32 %v810, 4294901760
    %812 = vmatpush1.msra.mxu0 %v811
    %813 = vmatprep.subr.mxu0 0.0
    %v814 = vand.u32 %v48, 4294901760
    %v815 = vsub.f32 %v48, %v814
    %v816 = vand.u32 %v815, 4294901760
    %817 = vmatpush1.msra.mxu0 %v816
    %818 = vmatprep.subr.mxu0 0.0
    %v819 = vand.u32 %v49, 4294901760
    %v820 = vsub.f32 %v49, %v819
    %v821 = vand.u32 %v820, 4294901760
    %822 = vmatpush1.msra.mxu0 %v821
    %823 = vmatprep.subr.mxu0 0.0
    %v824 = vand.u32 %v50, 4294901760
    %v825 = vsub.f32 %v50, %v824
    %v826 = vand.u32 %v825, 4294901760
    %827 = vmatpush1.msra.mxu0 %v826
    %828 = vmatprep.subr.mxu0 0.0
    %v829 = vand.u32 %v51, 4294901760
    %v830 = vsub.f32 %v51, %v829
    %v831 = vand.u32 %v830, 4294901760
    %832 = vmatpush1.msra.mxu0 %v831
    %833 = vmatprep.subr.mxu0 0.0
    %v834 = vand.u32 %v52, 4294901760
    %v835 = vsub.f32 %v52, %v834
    %v836 = vand.u32 %v835, 4294901760
    %837 = vmatpush1.msra.mxu0 %v836
    %838 = vmatprep.subr.mxu0 0.0
    %v839 = vand.u32 %v53, 4294901760
    %v840 = vsub.f32 %v53, %v839
    %v841 = vand.u32 %v840, 4294901760
    %842 = vmatpush1.msra.mxu0 %v841
    %v843 = vand.u32 %v83, 4294901760
    %844 = vmatprep.mubr.f32.mxu0 %v843
    %v845 = vand.u32 %v75, 4294901760
    %846 = vmatmul.mubr.f32.gmra.mrb[0].mxu0 %v845
    %v847 = vpop.f32.mrb[0].mxu0
    %v848 = vadd.f32 %v680, %v847
    %v849 = vpop.f32.mrb[0].mxu0
    %850 = vdwg.mxu0
    %851 = vmatprep.subr.mxu0 0.0
    %v852 = vand.u32 %v22, 4294901760
    %853 = vmatpush1.msra.mxu0 %v852
    %854 = vmatprep.subr.mxu0 0.0
    %v855 = vand.u32 %v23, 4294901760
    %856 = vmatpush1.msra.mxu0 %v855
    %857 = vmatprep.subr.mxu0 0.0
    %v858 = vand.u32 %v24, 4294901760
    %859 = vmatpush1.msra.mxu0 %v858
    %860 = vmatprep.subr.mxu0 0.0
    %v861 = vand.u32 %v25, 4294901760
    %862 = vmatpush1.msra.mxu0 %v861
    %863 = vmatprep.subr.mxu0 0.0
    %v864 = vand.u32 %v26, 4294901760
    %865 = vmatpush1.msra.mxu0 %v864
    %866 = vmatprep.subr.mxu0 0.0
    %v867 = vand.u32 %v27, 4294901760
    %868 = vmatpush1.msra.mxu0 %v867
    %869 = vmatprep.subr.mxu0 0.0
    %v870 = vand.u32 %v28, 4294901760
    %871 = vmatpush1.msra.mxu0 %v870
    %872 = vmatprep.subr.mxu0 0.0
    %v873 = vand.u32 %v29, 4294901760
    %874 = vmatpush1.msra.mxu0 %v873
    %875 = vmatprep.subr.mxu0 0.0
    %v876 = vand.u32 %v30, 4294901760
    %877 = vmatpush1.msra.mxu0 %v876
    %878 = vmatprep.subr.mxu0 0.0
    %v879 = vand.u32 %v31, 4294901760
    %880 = vmatpush1.msra.mxu0 %v879
    %881 = vmatprep.subr.mxu0 0.0
    %v882 = vand.u32 %v32, 4294901760
    %883 = vmatpush1.msra.mxu0 %v882
    %884 = vmatprep.subr.mxu0 0.0
    %v885 = vand.u32 %v33, 4294901760
    %886 = vmatpush1.msra.mxu0 %v885
    %887 = vmatprep.subr.mxu0 0.0
    %v888 = vand.u32 %v34, 4294901760
    %889 = vmatpush1.msra.mxu0 %v888
    %890 = vmatprep.subr.mxu0 0.0
    %v891 = vand.u32 %v35, 4294901760
    %892 = vmatpush1.msra.mxu0 %v891
    %893 = vmatprep.subr.mxu0 0.0
    %v894 = vand.u32 %v36, 4294901760
    %895 = vmatpush1.msra.mxu0 %v894
    %896 = vmatprep.subr.mxu0 0.0
    %v897 = vand.u32 %v37, 4294901760
    %898 = vmatpush1.msra.mxu0 %v897
    %899 = vmatprep.subr.mxu0 0.0
    %v900 = vand.u32 %v38, 4294901760
    %901 = vmatpush1.msra.mxu0 %v900
    %902 = vmatprep.subr.mxu0 0.0
    %v903 = vand.u32 %v39, 4294901760
    %904 = vmatpush1.msra.mxu0 %v903
    %905 = vmatprep.subr.mxu0 0.0
    %v906 = vand.u32 %v40, 4294901760
    %907 = vmatpush1.msra.mxu0 %v906
    %908 = vmatprep.subr.mxu0 0.0
    %v909 = vand.u32 %v41, 4294901760
    %910 = vmatpush1.msra.mxu0 %v909
    %911 = vmatprep.subr.mxu0 0.0
    %v912 = vand.u32 %v42, 4294901760
    %913 = vmatpush1.msra.mxu0 %v912
    %914 = vmatprep.subr.mxu0 0.0
    %v915 = vand.u32 %v43, 4294901760
    %916 = vmatpush1.msra.mxu0 %v915
    %917 = vmatprep.subr.mxu0 0.0
    %v918 = vand.u32 %v44, 4294901760
    %919 = vmatpush1.msra.mxu0 %v918
    %920 = vmatprep.subr.mxu0 0.0
    %v921 = vand.u32 %v45, 4294901760
    %922 = vmatpush1.msra.mxu0 %v921
    %923 = vmatprep.subr.mxu0 0.0
    %v924 = vand.u32 %v46, 4294901760
    %925 = vmatpush1.msra.mxu0 %v924
    %926 = vmatprep.subr.mxu0 0.0
    %v927 = vand.u32 %v47, 4294901760
    %928 = vmatpush1.msra.mxu0 %v927
    %929 = vmatprep.subr.mxu0 0.0
    %v930 = vand.u32 %v48, 4294901760
    %931 = vmatpush1.msra.mxu0 %v930
    %932 = vmatprep.subr.mxu0 0.0
    %v933 = vand.u32 %v49, 4294901760
    %934 = vmatpush1.msra.mxu0 %v933
    %935 = vmatprep.subr.mxu0 0.0
    %v936 = vand.u32 %v50, 4294901760
    %937 = vmatpush1.msra.mxu0 %v936
    %938 = vmatprep.subr.mxu0 0.0
    %v939 = vand.u32 %v51, 4294901760
    %940 = vmatpush1.msra.mxu0 %v939
    %941 = vmatprep.subr.mxu0 0.0
    %v942 = vand.u32 %v52, 4294901760
    %943 = vmatpush1.msra.mxu0 %v942
    %944 = vmatprep.subr.mxu0 0.0
    %v945 = vand.u32 %v53, 4294901760
    %946 = vmatpush1.msra.mxu0 %v945
    %v947 = vand.u32 %v83, 4294901760
    %948 = vmatprep.mubr.f32.mxu0 %v947
    %v949 = vand.u32 %v75, 4294901760
    %950 = vmatmul.mubr.f32.gmra.mrb[0].mxu0 %v949
    %v951 = vpop.f32.mrb[0].mxu0
    %v952 = vadd.f32 %v848, %v951
    %v953 = vpop.f32.mrb[0].mxu0
    %954 = vdwg.mxu0
    %955 = vmatprep.subr.mxu0 0.0
    %v956 = vand.u32 %v54, 4294901760
    %957 = vmatpush1.msra.mxu0 %v956
    %958 = vmatprep.subr.mxu0 0.0
    %v959 = vand.u32 %v55, 4294901760
    %960 = vmatpush1.msra.mxu0 %v959
    %961 = vmatprep.subr.mxu0 0.0
    %v962 = vand.u32 %v56, 4294901760
    %963 = vmatpush1.msra.mxu0 %v962
    %964 = vmatprep.subr.mxu0 0.0
    %v965 = vand.u32 %v57, 4294901760
    %966 = vmatpush1.msra.mxu0 %v965
    %967 = vmatprep.subr.mxu0 0.0
    %v968 = vand.u32 %v58, 4294901760
    %969 = vmatpush1.msra.mxu0 %v968
    %970 = vmatprep.subr.mxu0 0.0
    %v971 = vand.u32 %v91, 4294901760
    %972 = vmatpush1.msra.mxu0 %v971
    %973 = vmatprep.subr.mxu0 0.0
    %974 = vmatpush1.msra.mxu0 0.0
    %975 = vmatprep.subr.mxu0 0.0
    %976 = vmatpush1.msra.mxu0 0.0
    %977 = vmatprep.subr.mxu0 0.0
    %978 = vmatpush1.msra.mxu0 0.0
    %979 = vmatprep.subr.mxu0 0.0
    %980 = vmatpush1.msra.mxu0 0.0
    %981 = vmatprep.subr.mxu0 0.0
    %982 = vmatpush1.msra.mxu0 0.0
    %983 = vmatprep.subr.mxu0 0.0
    %984 = vmatpush1.msra.mxu0 0.0
    %985 = vmatprep.subr.mxu0 0.0
    %986 = vmatpush1.msra.mxu0 0.0
    %987 = vmatprep.subr.mxu0 0.0
    %988 = vmatpush1.msra.mxu0 0.0
    %989 = vmatprep.subr.mxu0 0.0
    %990 = vmatpush1.msra.mxu0 0.0
    %991 = vmatprep.subr.mxu0 0.0
    %992 = vmatpush1.msra.mxu0 0.0
    %993 = vmatprep.subr.mxu0 0.0
    %994 = vmatpush1.msra.mxu0 0.0
    %995 = vmatprep.subr.mxu0 0.0
    %996 = vmatpush1.msra.mxu0 0.0
    %997 = vmatprep.subr.mxu0 0.0
    %998 = vmatpush1.msra.mxu0 0.0
    %999 = vmatprep.subr.mxu0 0.0
    %1000 = vmatpush1.msra.mxu0 0.0
    %1001 = vmatprep.subr.mxu0 0.0
    %1002 = vmatpush1.msra.mxu0 0.0
    %1003 = vmatprep.subr.mxu0 0.0
    %1004 = vmatpush1.msra.mxu0 0.0
    %1005 = vmatprep.subr.mxu0 0.0
    %1006 = vmatpush1.msra.mxu0 0.0
    %1007 = vmatprep.subr.mxu0 0.0
    %1008 = vmatpush1.msra.mxu0 0.0
    %1009 = vmatprep.subr.mxu0 0.0
    %1010 = vmatpush1.msra.mxu0 0.0
    %1011 = vmatprep.subr.mxu0 0.0
    %1012 = vmatpush1.msra.mxu0 0.0
    %1013 = vmatprep.subr.mxu0 0.0
    %1014 = vmatpush1.msra.mxu0 0.0
    %1015 = vmatprep.subr.mxu0 0.0
    %1016 = vmatpush1.msra.mxu0 0.0
    %1017 = vmatprep.subr.mxu0 0.0
    %1018 = vmatpush1.msra.mxu0 0.0
    %1019 = vmatprep.subr.mxu0 0.0
    %1020 = vmatpush1.msra.mxu0 0.0
    %1021 = vmatprep.subr.mxu0 0.0
    %1022 = vmatpush1.msra.mxu0 0.0
    %1023 = vmatprep.subr.mxu0 0.0
    %1024 = vmatpush1.msra.mxu0 0.0
    %1025 = vmatprep.mubr.f32.mxu0 0.0
    %v1026 = vand.u32 %v87, 4294901760
    %v1027 = vsub.f32 %v87, %v1026
    %v1028 = vand.u32 %v1027, 4294901760
    %v1029 = vsub.f32 %v1027, %v1028
    %v1030 = vand.u32 %v1029, 4294901760
    %1031 = vmatmul.mubr.f32.gmra.mrb[0].mxu0 %v1030
    %v1032 = vpop.f32.mrb[0].mxu0
    %v1033 = vadd.f32 %v952, %v1032
    %v1034 = vpop.f32.mrb[0].mxu0
    %1035 = vdwg.mxu0
    %1036 = vmatprep.subr.mxu0 0.0
    %v1037 = vand.u32 %v54, 4294901760
    %v1038 = vsub.f32 %v54, %v1037
    %v1039 = vand.u32 %v1038, 4294901760
    %v1040 = vsub.f32 %v1038, %v1039
    %v1041 = vand.u32 %v1040, 4294901760
    %1042 = vmatpush1.msra.mxu0 %v1041
    %1043 = vmatprep.subr.mxu0 0.0
    %v1044 = vand.u32 %v55, 4294901760
    %v1045 = vsub.f32 %v55, %v1044
    %v1046 = vand.u32 %v1045, 4294901760
    %v1047 = vsub.f32 %v1045, %v1046
    %v1048 = vand.u32 %v1047, 4294901760
    %1049 = vmatpush1.msra.mxu0 %v1048
    %1050 = vmatprep.subr.mxu0 0.0
    %v1051 = vand.u32 %v56, 4294901760
    %v1052 = vsub.f32 %v56, %v1051
    %v1053 = vand.u32 %v1052, 4294901760
    %v1054 = vsub.f32 %v1052, %v1053
    %v1055 = vand.u32 %v1054, 4294901760
    %1056 = vmatpush1.msra.mxu0 %v1055
    %1057 = vmatprep.subr.mxu0 0.0
    %v1058 = vand.u32 %v57, 4294901760
    %v1059 = vsub.f32 %v57, %v1058
    %v1060 = vand.u32 %v1059, 4294901760
    %v1061 = vsub.f32 %v1059, %v1060
    %v1062 = vand.u32 %v1061, 4294901760
    %1063 = vmatpush1.msra.mxu0 %v1062
    %1064 = vmatprep.subr.mxu0 0.0
    %v1065 = vand.u32 %v58, 4294901760
    %v1066 = vsub.f32 %v58, %v1065
    %v1067 = vand.u32 %v1066, 4294901760
    %v1068 = vsub.f32 %v1066, %v1067
    %v1069 = vand.u32 %v1068, 4294901760
    %1070 = vmatpush1.msra.mxu0 %v1069
    %1071 = vmatprep.subr.mxu0 0.0
    %v1072 = vand.u32 %v91, 4294901760
    %v1073 = vsub.f32 %v91, %v1072
    %v1074 = vand.u32 %v1073, 4294901760
    %v1075 = vsub.f32 %v1073, %v1074
    %v1076 = vand.u32 %v1075, 4294901760
    %1077 = vmatpush1.msra.mxu0 %v1076
    %1078 = vmatprep.subr.mxu0 0.0
    %1079 = vmatpush1.msra.mxu0 0.0
    %1080 = vmatprep.subr.mxu0 0.0
    %1081 = vmatpush1.msra.mxu0 0.0
    %1082 = vmatprep.subr.mxu0 0.0
    %1083 = vmatpush1.msra.mxu0 0.0
    %1084 = vmatprep.subr.mxu0 0.0
    %1085 = vmatpush1.msra.mxu0 0.0
    %1086 = vmatprep.subr.mxu0 0.0
    %1087 = vmatpush1.msra.mxu0 0.0
    %1088 = vmatprep.subr.mxu0 0.0
    %1089 = vmatpush1.msra.mxu0 0.0
    %1090 = vmatprep.subr.mxu0 0.0
    %1091 = vmatpush1.msra.mxu0 0.0
    %1092 = vmatprep.subr.mxu0 0.0
    %1093 = vmatpush1.msra.mxu0 0.0
    %1094 = vmatprep.subr.mxu0 0.0
    %1095 = vmatpush1.msra.mxu0 0.0
    %1096 = vmatprep.subr.mxu0 0.0
    %1097 = vmatpush1.msra.mxu0 0.0
    %1098 = vmatprep.subr.mxu0 0.0
    %1099 = vmatpush1.msra.mxu0 0.0
    %1100 = vmatprep.subr.mxu0 0.0
    %1101 = vmatpush1.msra.mxu0 0.0
    %1102 = vmatprep.subr.mxu0 0.0
    %1103 = vmatpush1.msra.mxu0 0.0
    %1104 = vmatprep.subr.mxu0 0.0
    %1105 = vmatpush1.msra.mxu0 0.0
    %1106 = vmatprep.subr.mxu0 0.0
    %1107 = vmatpush1.msra.mxu0 0.0
    %1108 = vmatprep.subr.mxu0 0.0
    %1109 = vmatpush1.msra.mxu0 0.0
    %1110 = vmatprep.subr.mxu0 0.0
    %1111 = vmatpush1.msra.mxu0 0.0
    %1112 = vmatprep.subr.mxu0 0.0
    %1113 = vmatpush1.msra.mxu0 0.0
    %1114 = vmatprep.subr.mxu0 0.0
    %1115 = vmatpush1.msra.mxu0 0.0
    %1116 = vmatprep.subr.mxu0 0.0
    %1117 = vmatpush1.msra.mxu0 0.0
    %1118 = vmatprep.subr.mxu0 0.0
    %1119 = vmatpush1.msra.mxu0 0.0
    %1120 = vmatprep.subr.mxu0 0.0
    %1121 = vmatpush1.msra.mxu0 0.0
    %1122 = vmatprep.subr.mxu0 0.0
    %1123 = vmatpush1.msra.mxu0 0.0
    %1124 = vmatprep.subr.mxu0 0.0
    %1125 = vmatpush1.msra.mxu0 0.0
    %1126 = vmatprep.subr.mxu0 0.0
    %1127 = vmatpush1.msra.mxu0 0.0
    %1128 = vmatprep.subr.mxu0 0.0
    %1129 = vmatpush1.msra.mxu0 0.0
    %1130 = vmatprep.mubr.f32.mxu0 0.0
    %v1131 = vand.u32 %v87, 4294901760
    %1132 = vmatmul.mubr.f32.gmra.mrb[0].mxu0 %v1131
    %v1133 = vpop.f32.mrb[0].mxu0
    %v1134 = vadd.f32 %v1033, %v1133
    %v1135 = vpop.f32.mrb[0].mxu0
    %1136 = vdwg.mxu0
    %1137 = vmatprep.subr.mxu0 0.0
    %v1138 = vand.u32 %v54, 4294901760
    %v1139 = vsub.f32 %v54, %v1138
    %1140 = vmatpush1.msra.mxu0 %v1139
    %1141 = vmatprep.subr.mxu0 0.0
    %v1142 = vand.u32 %v55, 4294901760
    %v1143 = vsub.f32 %v55, %v1142
    %1144 = vmatpush1.msra.mxu0 %v1143
    %1145 = vmatprep.subr.mxu0 0.0
    %v1146 = vand.u32 %v56, 4294901760
    %v1147 = vsub.f32 %v56, %v1146
    %1148 = vmatpush1.msra.mxu0 %v1147
    %1149 = vmatprep.subr.mxu0 0.0
    %v1150 = vand.u32 %v57, 4294901760
    %v1151 = vsub.f32 %v57, %v1150
    %1152 = vmatpush1.msra.mxu0 %v1151
    %1153 = vmatprep.subr.mxu0 0.0
    %v1154 = vand.u32 %v58, 4294901760
    %v1155 = vsub.f32 %v58, %v1154
    %1156 = vmatpush1.msra.mxu0 %v1155
    %1157 = vmatprep.subr.mxu0 0.0
    %v1158 = vand.u32 %v91, 4294901760
    %v1159 = vsub.f32 %v91, %v1158
    %1160 = vmatpush1.msra.mxu0 %v1159
    %1161 = vmatprep.subr.mxu0 0.0
    %1162 = vmatpush1.msra.mxu0 0.0
    %1163 = vmatprep.subr.mxu0 0.0
    %1164 = vmatpush1.msra.mxu0 0.0
    %1165 = vmatprep.subr.mxu0 0.0
    %1166 = vmatpush1.msra.mxu0 0.0
    %1167 = vmatprep.subr.mxu0 0.0
    %1168 = vmatpush1.msra.mxu0 0.0
    %1169 = vmatprep.subr.mxu0 0.0
    %1170 = vmatpush1.msra.mxu0 0.0
    %1171 = vmatprep.subr.mxu0 0.0
    %1172 = vmatpush1.msra.mxu0 0.0
    %1173 = vmatprep.subr.mxu0 0.0
    %1174 = vmatpush1.msra.mxu0 0.0
    %1175 = vmatprep.subr.mxu0 0.0
    %1176 = vmatpush1.msra.mxu0 0.0
    %1177 = vmatprep.subr.mxu0 0.0
    %1178 = vmatpush1.msra.mxu0 0.0
    %1179 = vmatprep.subr.mxu0 0.0
    %1180 = vmatpush1.msra.mxu0 0.0
    %1181 = vmatprep.subr.mxu0 0.0
    %1182 = vmatpush1.msra.mxu0 0.0
    %1183 = vmatprep.subr.mxu0 0.0
    %1184 = vmatpush1.msra.mxu0 0.0
    %1185 = vmatprep.subr.mxu0 0.0
    %1186 = vmatpush1.msra.mxu0 0.0
    %1187 = vmatprep.subr.mxu0 0.0
    %1188 = vmatpush1.msra.mxu0 0.0
    %1189 = vmatprep.subr.mxu0 0.0
    %1190 = vmatpush1.msra.mxu0 0.0
    %1191 = vmatprep.subr.mxu0 0.0
    %1192 = vmatpush1.msra.mxu0 0.0
    %1193 = vmatprep.subr.mxu0 0.0
    %1194 = vmatpush1.msra.mxu0 0.0
    %1195 = vmatprep.subr.mxu0 0.0
    %1196 = vmatpush1.msra.mxu0 0.0
    %1197 = vmatprep.subr.mxu0 0.0
    %1198 = vmatpush1.msra.mxu0 0.0
    %1199 = vmatprep.subr.mxu0 0.0
    %1200 = vmatpush1.msra.mxu0 0.0
    %1201 = vmatprep.subr.mxu0 0.0
    %1202 = vmatpush1.msra.mxu0 0.0
    %1203 = vmatprep.subr.mxu0 0.0
    %1204 = vmatpush1.msra.mxu0 0.0
    %1205 = vmatprep.subr.mxu0 0.0
    %1206 = vmatpush1.msra.mxu0 0.0
    %1207 = vmatprep.subr.mxu0 0.0
    %1208 = vmatpush1.msra.mxu0 0.0
    %1209 = vmatprep.subr.mxu0 0.0
    %1210 = vmatpush1.msra.mxu0 0.0
    %1211 = vmatprep.subr.mxu0 0.0
    %1212 = vmatpush1.msra.mxu0 0.0
    %1213 = vmatprep.mubr.f32.mxu0 0.0
    %v1214 = vand.u32 %v87, 4294901760
    %v1215 = vsub.f32 %v87, %v1214
    %1216 = vmatmul.mubr.f32.gmra.mrb[0].mxu0 %v1215
    %v1217 = vpop.f32.mrb[0].mxu0
    %v1218 = vadd.f32 %v1134, %v1217
    %v1219 = vpop.f32.mrb[0].mxu0
    %1220 = vdwg.mxu0
    %1221 = vmatprep.subr.mxu0 0.0
    %v1222 = vand.u32 %v54, 4294901760
    %1223 = vmatpush1.msra.mxu0 %v1222
    %1224 = vmatprep.subr.mxu0 0.0
    %v1225 = vand.u32 %v55, 4294901760
    %1226 = vmatpush1.msra.mxu0 %v1225
    %1227 = vmatprep.subr.mxu0 0.0
    %v1228 = vand.u32 %v56, 4294901760
    %1229 = vmatpush1.msra.mxu0 %v1228
    %1230 = vmatprep.subr.mxu0 0.0
    %v1231 = vand.u32 %v57, 4294901760
    %1232 = vmatpush1.msra.mxu0 %v1231
    %1233 = vmatprep.subr.mxu0 0.0
    %v1234 = vand.u32 %v58, 4294901760
    %1235 = vmatpush1.msra.mxu0 %v1234
    %1236 = vmatprep.subr.mxu0 0.0
    %v1237 = vand.u32 %v91, 4294901760
    %1238 = vmatpush1.msra.mxu0 %v1237
    %1239 = vmatprep.subr.mxu0 0.0
    %1240 = vmatpush1.msra.mxu0 0.0
    %1241 = vmatprep.subr.mxu0 0.0
    %1242 = vmatpush1.msra.mxu0 0.0
    %1243 = vmatprep.subr.mxu0 0.0
    %1244 = vmatpush1.msra.mxu0 0.0
    %1245 = vmatprep.subr.mxu0 0.0
    %1246 = vmatpush1.msra.mxu0 0.0
    %1247 = vmatprep.subr.mxu0 0.0
    %1248 = vmatpush1.msra.mxu0 0.0
    %1249 = vmatprep.subr.mxu0 0.0
    %1250 = vmatpush1.msra.mxu0 0.0
    %1251 = vmatprep.subr.mxu0 0.0
    %1252 = vmatpush1.msra.mxu0 0.0
    %1253 = vmatprep.subr.mxu0 0.0
    %1254 = vmatpush1.msra.mxu0 0.0
    %1255 = vmatprep.subr.mxu0 0.0
    %1256 = vmatpush1.msra.mxu0 0.0
    %1257 = vmatprep.subr.mxu0 0.0
    %1258 = vmatpush1.msra.mxu0 0.0
    %1259 = vmatprep.subr.mxu0 0.0
    %1260 = vmatpush1.msra.mxu0 0.0
    %1261 = vmatprep.subr.mxu0 0.0
    %1262 = vmatpush1.msra.mxu0 0.0
    %1263 = vmatprep.subr.mxu0 0.0
    %1264 = vmatpush1.msra.mxu0 0.0
    %1265 = vmatprep.subr.mxu0 0.0
    %1266 = vmatpush1.msra.mxu0 0.0
    %1267 = vmatprep.subr.mxu0 0.0
    %1268 = vmatpush1.msra.mxu0 0.0
    %1269 = vmatprep.subr.mxu0 0.0
    %1270 = vmatpush1.msra.mxu0 0.0
    %1271 = vmatprep.subr.mxu0 0.0
    %1272 = vmatpush1.msra.mxu0 0.0
    %1273 = vmatprep.subr.mxu0 0.0
    %1274 = vmatpush1.msra.mxu0 0.0
    %1275 = vmatprep.subr.mxu0 0.0
    %1276 = vmatpush1.msra.mxu0 0.0
    %1277 = vmatprep.subr.mxu0 0.0
    %1278 = vmatpush1.msra.mxu0 0.0
    %1279 = vmatprep.subr.mxu0 0.0
    %1280 = vmatpush1.msra.mxu0 0.0
    %1281 = vmatprep.subr.mxu0 0.0
    %1282 = vmatpush1.msra.mxu0 0.0
    %1283 = vmatprep.subr.mxu0 0.0
    %1284 = vmatpush1.msra.mxu0 0.0
    %1285 = vmatprep.subr.mxu0 0.0
    %1286 = vmatpush1.msra.mxu0 0.0
    %1287 = vmatprep.subr.mxu0 0.0
    %1288 = vmatpush1.msra.mxu0 0.0
    %1289 = vmatprep.subr.mxu0 0.0
    %1290 = vmatpush1.msra.mxu0 0.0
    %1291 = vmatprep.mubr.f32.mxu0 0.0
    %v1292 = vand.u32 %v87, 4294901760
    %v1293 = vsub.f32 %v87, %v1292
    %v1294 = vand.u32 %v1293, 4294901760
    %1295 = vmatmul.mubr.f32.gmra.mrb[0].mxu0 %v1294
    %v1296 = vpop.f32.mrb[0].mxu0
    %v1297 = vadd.f32 %v1218, %v1296
    %v1298 = vpop.f32.mrb[0].mxu0
    %1299 = vdwg.mxu0
    %1300 = vmatprep.subr.mxu0 0.0
    %v1301 = vand.u32 %v54, 4294901760
    %v1302 = vsub.f32 %v54, %v1301
    %v1303 = vand.u32 %v1302, 4294901760
    %1304 = vmatpush1.msra.mxu0 %v1303
    %1305 = vmatprep.subr.mxu0 0.0
    %v1306 = vand.u32 %v55, 4294901760
    %v1307 = vsub.f32 %v55, %v1306
    %v1308 = vand.u32 %v1307, 4294901760
    %1309 = vmatpush1.msra.mxu0 %v1308
    %1310 = vmatprep.subr.mxu0 0.0
    %v1311 = vand.u32 %v56, 4294901760
    %v1312 = vsub.f32 %v56, %v1311
    %v1313 = vand.u32 %v1312, 4294901760
    %1314 = vmatpush1.msra.mxu0 %v1313
    %1315 = vmatprep.subr.mxu0 0.0
    %v1316 = vand.u32 %v57, 4294901760
    %v1317 = vsub.f32 %v57, %v1316
    %v1318 = vand.u32 %v1317, 4294901760
    %1319 = vmatpush1.msra.mxu0 %v1318
    %1320 = vmatprep.subr.mxu0 0.0
    %v1321 = vand.u32 %v58, 4294901760
    %v1322 = vsub.f32 %v58, %v1321
    %v1323 = vand.u32 %v1322, 4294901760
    %1324 = vmatpush1.msra.mxu0 %v1323
    %1325 = vmatprep.subr.mxu0 0.0
    %v1326 = vand.u32 %v91, 4294901760
    %v1327 = vsub.f32 %v91, %v1326
    %v1328 = vand.u32 %v1327, 4294901760
    %1329 = vmatpush1.msra.mxu0 %v1328
    %1330 = vmatprep.subr.mxu0 0.0
    %1331 = vmatpush1.msra.mxu0 0.0
    %1332 = vmatprep.subr.mxu0 0.0
    %1333 = vmatpush1.msra.mxu0 0.0
    %1334 = vmatprep.subr.mxu0 0.0
    %1335 = vmatpush1.msra.mxu0 0.0
    %1336 = vmatprep.subr.mxu0 0.0
    %1337 = vmatpush1.msra.mxu0 0.0
    %1338 = vmatprep.subr.mxu0 0.0
    %1339 = vmatpush1.msra.mxu0 0.0
    %1340 = vmatprep.subr.mxu0 0.0
    %1341 = vmatpush1.msra.mxu0 0.0
    %1342 = vmatprep.subr.mxu0 0.0
    %1343 = vmatpush1.msra.mxu0 0.0
    %1344 = vmatprep.subr.mxu0 0.0
    %1345 = vmatpush1.msra.mxu0 0.0
    %1346 = vmatprep.subr.mxu0 0.0
    %1347 = vmatpush1.msra.mxu0 0.0
    %1348 = vmatprep.subr.mxu0 0.0
    %1349 = vmatpush1.msra.mxu0 0.0
    %1350 = vmatprep.subr.mxu0 0.0
    %1351 = vmatpush1.msra.mxu0 0.0
    %1352 = vmatprep.subr.mxu0 0.0
    %1353 = vmatpush1.msra.mxu0 0.0
    %1354 = vmatprep.subr.mxu0 0.0
    %1355 = vmatpush1.msra.mxu0 0.0
    %1356 = vmatprep.subr.mxu0 0.0
    %1357 = vmatpush1.msra.mxu0 0.0
    %1358 = vmatprep.subr.mxu0 0.0
    %1359 = vmatpush1.msra.mxu0 0.0
    %1360 = vmatprep.subr.mxu0 0.0
    %1361 = vmatpush1.msra.mxu0 0.0
    %1362 = vmatprep.subr.mxu0 0.0
    %1363 = vmatpush1.msra.mxu0 0.0
    %1364 = vmatprep.subr.mxu0 0.0
    %1365 = vmatpush1.msra.mxu0 0.0
    %1366 = vmatprep.subr.mxu0 0.0
    %1367 = vmatpush1.msra.mxu0 0.0
    %1368 = vmatprep.subr.mxu0 0.0
    %1369 = vmatpush1.msra.mxu0 0.0
    %1370 = vmatprep.subr.mxu0 0.0
    %1371 = vmatpush1.msra.mxu0 0.0
    %1372 = vmatprep.subr.mxu0 0.0
    %1373 = vmatpush1.msra.mxu0 0.0
    %1374 = vmatprep.subr.mxu0 0.0
    %1375 = vmatpush1.msra.mxu0 0.0
    %1376 = vmatprep.subr.mxu0 0.0
    %1377 = vmatpush1.msra.mxu0 0.0
    %1378 = vmatprep.subr.mxu0 0.0
    %1379 = vmatpush1.msra.mxu0 0.0
    %1380 = vmatprep.subr.mxu0 0.0
    %1381 = vmatpush1.msra.mxu0 0.0
    %1382 = vmatprep.mubr.f32.mxu0 0.0
    %v1383 = vand.u32 %v87, 4294901760
    %1384 = vmatmul.mubr.f32.gmra.mrb[0].mxu0 %v1383
    %v1385 = vpop.f32.mrb[0].mxu0
    %v1386 = vadd.f32 %v1297, %v1385
    %v1387 = vpop.f32.mrb[0].mxu0
    %1388 = vdwg.mxu0
    %1389 = vmatprep.subr.mxu0 0.0
    %v1390 = vand.u32 %v54, 4294901760
    %1391 = vmatpush1.msra.mxu0 %v1390
    %1392 = vmatprep.subr.mxu0 0.0
    %v1393 = vand.u32 %v55, 4294901760
    %1394 = vmatpush1.msra.mxu0 %v1393
    %1395 = vmatprep.subr.mxu0 0.0
    %v1396 = vand.u32 %v56, 4294901760
    %1397 = vmatpush1.msra.mxu0 %v1396
    %1398 = vmatprep.subr.mxu0 0.0
    %v1399 = vand.u32 %v57, 4294901760
    %1400 = vmatpush1.msra.mxu0 %v1399
    %1401 = vmatprep.subr.mxu0 0.0
    %v1402 = vand.u32 %v58, 4294901760
    %1403 = vmatpush1.msra.mxu0 %v1402
    %1404 = vmatprep.subr.mxu0 0.0
    %v1405 = vand.u32 %v91, 4294901760
    %1406 = vmatpush1.msra.mxu0 %v1405
    %1407 = vmatprep.subr.mxu0 0.0
    %1408 = vmatpush1.msra.mxu0 0.0
    %1409 = vmatprep.subr.mxu0 0.0
    %1410 = vmatpush1.msra.mxu0 0.0
    %1411 = vmatprep.subr.mxu0 0.0
    %1412 = vmatpush1.msra.mxu0 0.0
    %1413 = vmatprep.subr.mxu0 0.0
    %1414 = vmatpush1.msra.mxu0 0.0
    %1415 = vmatprep.subr.mxu0 0.0
    %1416 = vmatpush1.msra.mxu0 0.0
    %1417 = vmatprep.subr.mxu0 0.0
    %1418 = vmatpush1.msra.mxu0 0.0
    %1419 = vmatprep.subr.mxu0 0.0
    %1420 = vmatpush1.msra.mxu0 0.0
    %1421 = vmatprep.subr.mxu0 0.0
    %1422 = vmatpush1.msra.mxu0 0.0
    %1423 = vmatprep.subr.mxu0 0.0
    %1424 = vmatpush1.msra.mxu0 0.0
    %1425 = vmatprep.subr.mxu0 0.0
    %1426 = vmatpush1.msra.mxu0 0.0
    %1427 = vmatprep.subr.mxu0 0.0
    %1428 = vmatpush1.msra.mxu0 0.0
    %1429 = vmatprep.subr.mxu0 0.0
    %1430 = vmatpush1.msra.mxu0 0.0
    %1431 = vmatprep.subr.mxu0 0.0
    %1432 = vmatpush1.msra.mxu0 0.0
    %1433 = vmatprep.subr.mxu0 0.0
    %1434 = vmatpush1.msra.mxu0 0.0
    %1435 = vmatprep.subr.mxu0 0.0
    %1436 = vmatpush1.msra.mxu0 0.0
    %1437 = vmatprep.subr.mxu0 0.0
    %1438 = vmatpush1.msra.mxu0 0.0
    %1439 = vmatprep.subr.mxu0 0.0
    %1440 = vmatpush1.msra.mxu0 0.0
    %1441 = vmatprep.subr.mxu0 0.0
    %1442 = vmatpush1.msra.mxu0 0.0
    %1443 = vmatprep.subr.mxu0 0.0
    %1444 = vmatpush1.msra.mxu0 0.0
    %1445 = vmatprep.subr.mxu0 0.0
    %1446 = vmatpush1.msra.mxu0 0.0
    %1447 = vmatprep.subr.mxu0 0.0
    %1448 = vmatpush1.msra.mxu0 0.0
    %1449 = vmatprep.subr.mxu0 0.0
    %1450 = vmatpush1.msra.mxu0 0.0
    %1451 = vmatprep.subr.mxu0 0.0
    %1452 = vmatpush1.msra.mxu0 0.0
    %1453 = vmatprep.subr.mxu0 0.0
    %1454 = vmatpush1.msra.mxu0 0.0
    %1455 = vmatprep.subr.mxu0 0.0
    %1456 = vmatpush1.msra.mxu0 0.0
    %1457 = vmatprep.subr.mxu0 0.0
    %1458 = vmatpush1.msra.mxu0 0.0
    %1459 = vmatprep.mubr.f32.mxu0 0.0
    %v1460 = vand.u32 %v87, 4294901760
    %1461 = vmatmul.mubr.f32.gmra.mrb[0].mxu0 %v1460
    %v1462 = vpop.f32.mrb[0].mxu0
    %v1463 = vadd.f32 %v1386, %v1462
    %v1464 = vpop.f32.mrb[0].mxu0
    %1465 = vdwg.mxu0
    %v1466 = vadd.f32 %v1463, 0.0
    %vm1467 = vcmp.gt.f32.partialorder %v1466, 1.0
    %v1468 = vsel %vm1467, 1, 0
    %v1469 = vcvt.s32.f32 %v1468
    %v1470 = vmul.f32 %v1466, 0.95
    %v1471 = vadd.f32 %v1470, %v1463
    %v1472 = vsub.f32 %v1471, %v1469
    %vm1473 = vcmp.gt.f32.partialorder %v1472, 1.0
    %v1474 = vsel %vm1473, 1, 0
    %v1475 = vcvt.s32.f32 %v1474
    %v1476 = vmul.f32 %v1472, 0.95
    %v1477 = vadd.f32 %v1476, %v1463
    %v1478 = vsub.f32 %v1477, %v1475
    %vm1479 = vcmp.gt.f32.partialorder %v1478, 1.0
    %v1480 = vsel %vm1479, 1, 0
    %v1481 = vcvt.s32.f32 %v1480
    %v1482 = vmul.f32 %v1478, 0.95
    %v1483 = vadd.f32 %v1482, %v1463
    %v1484 = vsub.f32 %v1483, %v1481
    %vm1485 = vcmp.gt.f32.partialorder %v1484, 1.0
    %v1486 = vsel %vm1485, 1, 0
    %v1487 = vcvt.s32.f32 %v1486
    %v1488 = vmul.f32 %v1484, 0.95
    %v1489 = vadd.f32 %v1488, %v1463
    %v1490 = vsub.f32 %v1489, %v1487
    %vm1491 = vcmp.gt.f32.partialorder %v1490, 1.0
    %v1492 = vsel %vm1491, 1, 0
    %v1493 = vcvt.s32.f32 %v1492
    %v1494 = vmul.f32 %v1490, 0.95
    %v1495 = vadd.f32 %v1494, %v1463
    %v1496 = vsub.f32 %v1495, %v1493
    %vm1497 = vcmp.gt.f32.partialorder %v1496, 1.0
    %v1498 = vsel %vm1497, 1, 0
    %v1499 = vcvt.s32.f32 %v1498
    %v1500 = vmul.f32 %v1496, 0.95
    %v1501 = vadd.f32 %v1500, %v1463
    %v1502 = vsub.f32 %v1501, %v1499
    %vm1503 = vcmp.gt.f32.partialorder %v1502, 1.0
    %v1504 = vsel %vm1503, 1, 0
    %v1505 = vcvt.s32.f32 %v1504
    %v1506 = vmul.f32 %v1502, 0.95
    %v1507 = vadd.f32 %v1506, %v1463
    %v1508 = vsub.f32 %v1507, %v1505
    %vm1509 = vcmp.gt.f32.partialorder %v1508, 1.0
    %v1510 = vsel %vm1509, 1, 0
    %v1511 = vcvt.s32.f32 %v1510
    %v1513 = vrot.slane %v1475, 6
    %v1516 = vrot.slane %v1481, 4
    %v1519 = vrot.slane %v1487, 2
    %v1522 = vrot.slane %v1499, 6
    %v1525 = vrot.slane %v1505, 4
    %v1528 = vrot.slane %v1511, 2
    %vm1530 = vcmask 1041408
    %v1531 = vsel %vm1530, %v1469, %v1513
    %v1532 = vsel %vm89, %v1531, %v1516
    %vm1533 = vcmask 1045504
    %v1534 = vsel %vm1533, %v1532, %v1519
    %v1535 = vsel %vm1530, %v1493, %v1522
    %v1536 = vsel %vm89, %v1535, %v1525
    %v1537 = vsel %vm1533, %v1536, %v1528
    %v1538 = vld [vmem:[%s3] sm:$0xff]
    %v1539 = vld [vmem:[%s3 + $0x8] sm:$0xff]
    %v1540 = vld [vmem:[%s3 + $0x10] sm:$0xff]
    %v1541 = vld [vmem:[%s3 + $0x18] sm:$0xff]
    %v1542 = vld [vmem:[%s4] sm:$0x1]
    %v1544 = vlaneseq
    %v1545 = vshrl.u32 %v1544, 7
    %v1546 = vsub.s32 0, %v1545
    %v1547 = vrot.slane %v1542, %v1546
    %vm1549 = vcmask 261120
    %v1551 = vsel %vm1549, %v1534, 0
    %v1554 = vsel %vm1549, %v1537, 0
    %1556 = vmatprep.subr.mxu0 0.0
    %v1557 = vand.u32 %v1538, 4294901760
    %1558 = vmatpush1.msra.mxu0 %v1557
    %1559 = vmatprep.subr.mxu0 0.0
    %v1560 = vand.u32 %v1539, 4294901760
    %1561 = vmatpush1.msra.mxu0 %v1560
    %1562 = vmatprep.subr.mxu0 0.0
    %v1563 = vand.u32 %v1540, 4294901760
    %1564 = vmatpush1.msra.mxu0 %v1563
    %1565 = vmatprep.subr.mxu0 0.0
    %v1566 = vand.u32 %v1541, 4294901760
    %1567 = vmatpush1.msra.mxu0 %v1566
    %1568 = vmatprep.subr.mxu0 0.0
    %1569 = vmatpush1.msra.mxu0 0.0
    %1570 = vmatprep.subr.mxu0 0.0
    %1571 = vmatpush1.msra.mxu0 0.0
    %1572 = vmatprep.subr.mxu0 0.0
    %1573 = vmatpush1.msra.mxu0 0.0
    %1574 = vmatprep.subr.mxu0 0.0
    %1575 = vmatpush1.msra.mxu0 0.0
    %1576 = vmatprep.subr.mxu0 0.0
    %1577 = vmatpush1.msra.mxu0 0.0
    %1578 = vmatprep.subr.mxu0 0.0
    %1579 = vmatpush1.msra.mxu0 0.0
    %1580 = vmatprep.subr.mxu0 0.0
    %1581 = vmatpush1.msra.mxu0 0.0
    %1582 = vmatprep.subr.mxu0 0.0
    %1583 = vmatpush1.msra.mxu0 0.0
    %1584 = vmatprep.subr.mxu0 0.0
    %1585 = vmatpush1.msra.mxu0 0.0
    %1586 = vmatprep.subr.mxu0 0.0
    %1587 = vmatpush1.msra.mxu0 0.0
    %1588 = vmatprep.subr.mxu0 0.0
    %1589 = vmatpush1.msra.mxu0 0.0
    %1590 = vmatprep.subr.mxu0 0.0
    %1591 = vmatpush1.msra.mxu0 0.0
    %1592 = vmatprep.subr.mxu0 0.0
    %1593 = vmatpush1.msra.mxu0 0.0
    %1594 = vmatprep.subr.mxu0 0.0
    %1595 = vmatpush1.msra.mxu0 0.0
    %1596 = vmatprep.subr.mxu0 0.0
    %1597 = vmatpush1.msra.mxu0 0.0
    %1598 = vmatprep.subr.mxu0 0.0
    %1599 = vmatpush1.msra.mxu0 0.0
    %1600 = vmatprep.subr.mxu0 0.0
    %1601 = vmatpush1.msra.mxu0 0.0
    %1602 = vmatprep.subr.mxu0 0.0
    %1603 = vmatpush1.msra.mxu0 0.0
    %1604 = vmatprep.subr.mxu0 0.0
    %1605 = vmatpush1.msra.mxu0 0.0
    %1606 = vmatprep.subr.mxu0 0.0
    %1607 = vmatpush1.msra.mxu0 0.0
    %1608 = vmatprep.subr.mxu0 0.0
    %1609 = vmatpush1.msra.mxu0 0.0
    %1610 = vmatprep.subr.mxu0 0.0
    %1611 = vmatpush1.msra.mxu0 0.0
    %1612 = vmatprep.subr.mxu0 0.0
    %1613 = vmatpush1.msra.mxu0 0.0
    %1614 = vmatprep.subr.mxu0 0.0
    %1615 = vmatpush1.msra.mxu0 0.0
    %1616 = vmatprep.subr.mxu0 0.0
    %1617 = vmatpush1.msra.mxu0 0.0
    %1618 = vmatprep.subr.mxu0 0.0
    %1619 = vmatpush1.msra.mxu0 0.0
    %1620 = vmatprep.subr.mxu0 0.0
    %1621 = vmatpush1.msra.mxu0 0.0
    %1622 = vmatprep.subr.mxu0 0.0
    %1623 = vmatpush1.msra.mxu0 0.0
    %1624 = vmatprep.mubr.f32.mxu0 0.0
    %v1625 = vand.u32 %v1551, 4294901760
    %v1626 = vsub.f32 %v1551, %v1625
    %v1627 = vand.u32 %v1626, 4294901760
    %v1628 = vsub.f32 %v1626, %v1627
    %v1629 = vand.u32 %v1628, 4294901760
    %1630 = vmatmul.mubr.f32.gmra.mrb[0].mxu0 %v1629
    %v1631 = vpop.f32.mrb[0].mxu0
    %v1632 = vadd.f32 %v1547, %v1631
    %v1633 = vpop.f32.mrb[0].mxu0
    %1634 = vmatprep.mubr.f32.mxu0 0.0
    %v1635 = vand.u32 %v1554, 4294901760
    %v1636 = vsub.f32 %v1554, %v1635
    %v1637 = vand.u32 %v1636, 4294901760
    %v1638 = vsub.f32 %v1636, %v1637
    %v1639 = vand.u32 %v1638, 4294901760
    %1640 = vmatmul.mubr.f32.gmra.mrb[0].mxu0 %v1639
    %v1641 = vpop.f32.mrb[0].mxu0
    %v1642 = vadd.f32 %v1547, %v1641
    %v1643 = vpop.f32.mrb[0].mxu0
    %1644 = vdwg.mxu0
    %1645 = vmatprep.subr.mxu0 0.0
    %v1646 = vand.u32 %v1538, 4294901760
    %v1647 = vsub.f32 %v1538, %v1646
    %v1648 = vand.u32 %v1647, 4294901760
    %v1649 = vsub.f32 %v1647, %v1648
    %v1650 = vand.u32 %v1649, 4294901760
    %1651 = vmatpush1.msra.mxu0 %v1650
    %1652 = vmatprep.subr.mxu0 0.0
    %v1653 = vand.u32 %v1539, 4294901760
    %v1654 = vsub.f32 %v1539, %v1653
    %v1655 = vand.u32 %v1654, 4294901760
    %v1656 = vsub.f32 %v1654, %v1655
    %v1657 = vand.u32 %v1656, 4294901760
    %1658 = vmatpush1.msra.mxu0 %v1657
    %1659 = vmatprep.subr.mxu0 0.0
    %v1660 = vand.u32 %v1540, 4294901760
    %v1661 = vsub.f32 %v1540, %v1660
    %v1662 = vand.u32 %v1661, 4294901760
    %v1663 = vsub.f32 %v1661, %v1662
    %v1664 = vand.u32 %v1663, 4294901760
    %1665 = vmatpush1.msra.mxu0 %v1664
    %1666 = vmatprep.subr.mxu0 0.0
    %v1667 = vand.u32 %v1541, 4294901760
    %v1668 = vsub.f32 %v1541, %v1667
    %v1669 = vand.u32 %v1668, 4294901760
    %v1670 = vsub.f32 %v1668, %v1669
    %v1671 = vand.u32 %v1670, 4294901760
    %1672 = vmatpush1.msra.mxu0 %v1671
    %1673 = vmatprep.subr.mxu0 0.0
    %1674 = vmatpush1.msra.mxu0 0.0
    %1675 = vmatprep.subr.mxu0 0.0
    %1676 = vmatpush1.msra.mxu0 0.0
    %1677 = vmatprep.subr.mxu0 0.0
    %1678 = vmatpush1.msra.mxu0 0.0
    %1679 = vmatprep.subr.mxu0 0.0
    %1680 = vmatpush1.msra.mxu0 0.0
    %1681 = vmatprep.subr.mxu0 0.0
    %1682 = vmatpush1.msra.mxu0 0.0
    %1683 = vmatprep.subr.mxu0 0.0
    %1684 = vmatpush1.msra.mxu0 0.0
    %1685 = vmatprep.subr.mxu0 0.0
    %1686 = vmatpush1.msra.mxu0 0.0
    %1687 = vmatprep.subr.mxu0 0.0
    %1688 = vmatpush1.msra.mxu0 0.0
    %1689 = vmatprep.subr.mxu0 0.0
    %1690 = vmatpush1.msra.mxu0 0.0
    %1691 = vmatprep.subr.mxu0 0.0
    %1692 = vmatpush1.msra.mxu0 0.0
    %1693 = vmatprep.subr.mxu0 0.0
    %1694 = vmatpush1.msra.mxu0 0.0
    %1695 = vmatprep.subr.mxu0 0.0
    %1696 = vmatpush1.msra.mxu0 0.0
    %1697 = vmatprep.subr.mxu0 0.0
    %1698 = vmatpush1.msra.mxu0 0.0
    %1699 = vmatprep.subr.mxu0 0.0
    %1700 = vmatpush1.msra.mxu0 0.0
    %1701 = vmatprep.subr.mxu0 0.0
    %1702 = vmatpush1.msra.mxu0 0.0
    %1703 = vmatprep.subr.mxu0 0.0
    %1704 = vmatpush1.msra.mxu0 0.0
    %1705 = vmatprep.subr.mxu0 0.0
    %1706 = vmatpush1.msra.mxu0 0.0
    %1707 = vmatprep.subr.mxu0 0.0
    %1708 = vmatpush1.msra.mxu0 0.0
    %1709 = vmatprep.subr.mxu0 0.0
    %1710 = vmatpush1.msra.mxu0 0.0
    %1711 = vmatprep.subr.mxu0 0.0
    %1712 = vmatpush1.msra.mxu0 0.0
    %1713 = vmatprep.subr.mxu0 0.0
    %1714 = vmatpush1.msra.mxu0 0.0
    %1715 = vmatprep.subr.mxu0 0.0
    %1716 = vmatpush1.msra.mxu0 0.0
    %1717 = vmatprep.subr.mxu0 0.0
    %1718 = vmatpush1.msra.mxu0 0.0
    %1719 = vmatprep.subr.mxu0 0.0
    %1720 = vmatpush1.msra.mxu0 0.0
    %1721 = vmatprep.subr.mxu0 0.0
    %1722 = vmatpush1.msra.mxu0 0.0
    %1723 = vmatprep.subr.mxu0 0.0
    %1724 = vmatpush1.msra.mxu0 0.0
    %1725 = vmatprep.subr.mxu0 0.0
    %1726 = vmatpush1.msra.mxu0 0.0
    %1727 = vmatprep.subr.mxu0 0.0
    %1728 = vmatpush1.msra.mxu0 0.0
    %1729 = vmatprep.mubr.f32.mxu0 0.0
    %v1730 = vand.u32 %v1551, 4294901760
    %1731 = vmatmul.mubr.f32.gmra.mrb[0].mxu0 %v1730
    %v1732 = vpop.f32.mrb[0].mxu0
    %v1733 = vadd.f32 %v1632, %v1732
    %v1734 = vpop.f32.mrb[0].mxu0
    %1735 = vmatprep.mubr.f32.mxu0 0.0
    %v1736 = vand.u32 %v1554, 4294901760
    %1737 = vmatmul.mubr.f32.gmra.mrb[0].mxu0 %v1736
    %v1738 = vpop.f32.mrb[0].mxu0
    %v1739 = vadd.f32 %v1642, %v1738
    %v1740 = vpop.f32.mrb[0].mxu0
    %1741 = vdwg.mxu0
    %1742 = vmatprep.subr.mxu0 0.0
    %v1743 = vand.u32 %v1538, 4294901760
    %v1744 = vsub.f32 %v1538, %v1743
    %1745 = vmatpush1.msra.mxu0 %v1744
    %1746 = vmatprep.subr.mxu0 0.0
    %v1747 = vand.u32 %v1539, 4294901760
    %v1748 = vsub.f32 %v1539, %v1747
    %1749 = vmatpush1.msra.mxu0 %v1748
    %1750 = vmatprep.subr.mxu0 0.0
    %v1751 = vand.u32 %v1540, 4294901760
    %v1752 = vsub.f32 %v1540, %v1751
    %1753 = vmatpush1.msra.mxu0 %v1752
    %1754 = vmatprep.subr.mxu0 0.0
    %v1755 = vand.u32 %v1541, 4294901760
    %v1756 = vsub.f32 %v1541, %v1755
    %1757 = vmatpush1.msra.mxu0 %v1756
    %1758 = vmatprep.subr.mxu0 0.0
    %1759 = vmatpush1.msra.mxu0 0.0
    %1760 = vmatprep.subr.mxu0 0.0
    %1761 = vmatpush1.msra.mxu0 0.0
    %1762 = vmatprep.subr.mxu0 0.0
    %1763 = vmatpush1.msra.mxu0 0.0
    %1764 = vmatprep.subr.mxu0 0.0
    %1765 = vmatpush1.msra.mxu0 0.0
    %1766 = vmatprep.subr.mxu0 0.0
    %1767 = vmatpush1.msra.mxu0 0.0
    %1768 = vmatprep.subr.mxu0 0.0
    %1769 = vmatpush1.msra.mxu0 0.0
    %1770 = vmatprep.subr.mxu0 0.0
    %1771 = vmatpush1.msra.mxu0 0.0
    %1772 = vmatprep.subr.mxu0 0.0
    %1773 = vmatpush1.msra.mxu0 0.0
    %1774 = vmatprep.subr.mxu0 0.0
    %1775 = vmatpush1.msra.mxu0 0.0
    %1776 = vmatprep.subr.mxu0 0.0
    %1777 = vmatpush1.msra.mxu0 0.0
    %1778 = vmatprep.subr.mxu0 0.0
    %1779 = vmatpush1.msra.mxu0 0.0
    %1780 = vmatprep.subr.mxu0 0.0
    %1781 = vmatpush1.msra.mxu0 0.0
    %1782 = vmatprep.subr.mxu0 0.0
    %1783 = vmatpush1.msra.mxu0 0.0
    %1784 = vmatprep.subr.mxu0 0.0
    %1785 = vmatpush1.msra.mxu0 0.0
    %1786 = vmatprep.subr.mxu0 0.0
    %1787 = vmatpush1.msra.mxu0 0.0
    %1788 = vmatprep.subr.mxu0 0.0
    %1789 = vmatpush1.msra.mxu0 0.0
    %1790 = vmatprep.subr.mxu0 0.0
    %1791 = vmatpush1.msra.mxu0 0.0
    %1792 = vmatprep.subr.mxu0 0.0
    %1793 = vmatpush1.msra.mxu0 0.0
    %1794 = vmatprep.subr.mxu0 0.0
    %1795 = vmatpush1.msra.mxu0 0.0
    %1796 = vmatprep.subr.mxu0 0.0
    %1797 = vmatpush1.msra.mxu0 0.0
    %1798 = vmatprep.subr.mxu0 0.0
    %1799 = vmatpush1.msra.mxu0 0.0
    %1800 = vmatprep.subr.mxu0 0.0
    %1801 = vmatpush1.msra.mxu0 0.0
    %1802 = vmatprep.subr.mxu0 0.0
    %1803 = vmatpush1.msra.mxu0 0.0
    %1804 = vmatprep.subr.mxu0 0.0
    %1805 = vmatpush1.msra.mxu0 0.0
    %1806 = vmatprep.subr.mxu0 0.0
    %1807 = vmatpush1.msra.mxu0 0.0
    %1808 = vmatprep.subr.mxu0 0.0
    %1809 = vmatpush1.msra.mxu0 0.0
    %1810 = vmatprep.subr.mxu0 0.0
    %1811 = vmatpush1.msra.mxu0 0.0
    %1812 = vmatprep.subr.mxu0 0.0
    %1813 = vmatpush1.msra.mxu0 0.0
    %1814 = vmatprep.mubr.f32.mxu0 0.0
    %v1815 = vand.u32 %v1551, 4294901760
    %v1816 = vsub.f32 %v1551, %v1815
    %1817 = vmatmul.mubr.f32.gmra.mrb[0].mxu0 %v1816
    %v1818 = vpop.f32.mrb[0].mxu0
    %v1819 = vadd.f32 %v1733, %v1818
    %v1820 = vpop.f32.mrb[0].mxu0
    %1821 = vmatprep.mubr.f32.mxu0 0.0
    %v1822 = vand.u32 %v1554, 4294901760
    %v1823 = vsub.f32 %v1554, %v1822
    %1824 = vmatmul.mubr.f32.gmra.mrb[0].mxu0 %v1823
    %v1825 = vpop.f32.mrb[0].mxu0
    %v1826 = vadd.f32 %v1739, %v1825
    %v1827 = vpop.f32.mrb[0].mxu0
    %1828 = vdwg.mxu0
    %1829 = vmatprep.subr.mxu0 0.0
    %v1830 = vand.u32 %v1538, 4294901760
    %1831 = vmatpush1.msra.mxu0 %v1830
    %1832 = vmatprep.subr.mxu0 0.0
    %v1833 = vand.u32 %v1539, 4294901760
    %1834 = vmatpush1.msra.mxu0 %v1833
    %1835 = vmatprep.subr.mxu0 0.0
    %v1836 = vand.u32 %v1540, 4294901760
    %1837 = vmatpush1.msra.mxu0 %v1836
    %1838 = vmatprep.subr.mxu0 0.0
    %v1839 = vand.u32 %v1541, 4294901760
    %1840 = vmatpush1.msra.mxu0 %v1839
    %1841 = vmatprep.subr.mxu0 0.0
    %1842 = vmatpush1.msra.mxu0 0.0
    %1843 = vmatprep.subr.mxu0 0.0
    %1844 = vmatpush1.msra.mxu0 0.0
    %1845 = vmatprep.subr.mxu0 0.0
    %1846 = vmatpush1.msra.mxu0 0.0
    %1847 = vmatprep.subr.mxu0 0.0
    %1848 = vmatpush1.msra.mxu0 0.0
    %1849 = vmatprep.subr.mxu0 0.0
    %1850 = vmatpush1.msra.mxu0 0.0
    %1851 = vmatprep.subr.mxu0 0.0
    %1852 = vmatpush1.msra.mxu0 0.0
    %1853 = vmatprep.subr.mxu0 0.0
    %1854 = vmatpush1.msra.mxu0 0.0
    %1855 = vmatprep.subr.mxu0 0.0
    %1856 = vmatpush1.msra.mxu0 0.0
    %1857 = vmatprep.subr.mxu0 0.0
    %1858 = vmatpush1.msra.mxu0 0.0
    %1859 = vmatprep.subr.mxu0 0.0
    %1860 = vmatpush1.msra.mxu0 0.0
    %1861 = vmatprep.subr.mxu0 0.0
    %1862 = vmatpush1.msra.mxu0 0.0
    %1863 = vmatprep.subr.mxu0 0.0
    %1864 = vmatpush1.msra.mxu0 0.0
    %1865 = vmatprep.subr.mxu0 0.0
    %1866 = vmatpush1.msra.mxu0 0.0
    %1867 = vmatprep.subr.mxu0 0.0
    %1868 = vmatpush1.msra.mxu0 0.0
    %1869 = vmatprep.subr.mxu0 0.0
    %1870 = vmatpush1.msra.mxu0 0.0
    %1871 = vmatprep.subr.mxu0 0.0
    %1872 = vmatpush1.msra.mxu0 0.0
    %1873 = vmatprep.subr.mxu0 0.0
    %1874 = vmatpush1.msra.mxu0 0.0
    %1875 = vmatprep.subr.mxu0 0.0
    %1876 = vmatpush1.msra.mxu0 0.0
    %1877 = vmatprep.subr.mxu0 0.0
    %1878 = vmatpush1.msra.mxu0 0.0
    %1879 = vmatprep.subr.mxu0 0.0
    %1880 = vmatpush1.msra.mxu0 0.0
    %1881 = vmatprep.subr.mxu0 0.0
    %1882 = vmatpush1.msra.mxu0 0.0
    %1883 = vmatprep.subr.mxu0 0.0
    %1884 = vmatpush1.msra.mxu0 0.0
    %1885 = vmatprep.subr.mxu0 0.0
    %1886 = vmatpush1.msra.mxu0 0.0
    %1887 = vmatprep.subr.mxu0 0.0
    %1888 = vmatpush1.msra.mxu0 0.0
    %1889 = vmatprep.subr.mxu0 0.0
    %1890 = vmatpush1.msra.mxu0 0.0
    %1891 = vmatprep.subr.mxu0 0.0
    %1892 = vmatpush1.msra.mxu0 0.0
    %1893 = vmatprep.subr.mxu0 0.0
    %1894 = vmatpush1.msra.mxu0 0.0
    %1895 = vmatprep.subr.mxu0 0.0
    %1896 = vmatpush1.msra.mxu0 0.0
    %1897 = vmatprep.mubr.f32.mxu0 0.0
    %v1898 = vand.u32 %v1551, 4294901760
    %v1899 = vsub.f32 %v1551, %v1898
    %v1900 = vand.u32 %v1899, 4294901760
    %1901 = vmatmul.mubr.f32.gmra.mrb[0].mxu0 %v1900
    %v1902 = vpop.f32.mrb[0].mxu0
    %v1903 = vadd.f32 %v1819, %v1902
    %v1904 = vpop.f32.mrb[0].mxu0
    %1905 = vmatprep.mubr.f32.mxu0 0.0
    %v1906 = vand.u32 %v1554, 4294901760
    %v1907 = vsub.f32 %v1554, %v1906
    %v1908 = vand.u32 %v1907, 4294901760
    %1909 = vmatmul.mubr.f32.gmra.mrb[0].mxu0 %v1908
    %v1910 = vpop.f32.mrb[0].mxu0
    %v1911 = vadd.f32 %v1826, %v1910
    %v1912 = vpop.f32.mrb[0].mxu0
    %1913 = vdwg.mxu0
    %1914 = vmatprep.subr.mxu0 0.0
    %v1915 = vand.u32 %v1538, 4294901760
    %v1916 = vsub.f32 %v1538, %v1915
    %v1917 = vand.u32 %v1916, 4294901760
    %1918 = vmatpush1.msra.mxu0 %v1917
    %1919 = vmatprep.subr.mxu0 0.0
    %v1920 = vand.u32 %v1539, 4294901760
    %v1921 = vsub.f32 %v1539, %v1920
    %v1922 = vand.u32 %v1921, 4294901760
    %1923 = vmatpush1.msra.mxu0 %v1922
    %1924 = vmatprep.subr.mxu0 0.0
    %v1925 = vand.u32 %v1540, 4294901760
    %v1926 = vsub.f32 %v1540, %v1925
    %v1927 = vand.u32 %v1926, 4294901760
    %1928 = vmatpush1.msra.mxu0 %v1927
    %1929 = vmatprep.subr.mxu0 0.0
    %v1930 = vand.u32 %v1541, 4294901760
    %v1931 = vsub.f32 %v1541, %v1930
    %v1932 = vand.u32 %v1931, 4294901760
    %1933 = vmatpush1.msra.mxu0 %v1932
    %1934 = vmatprep.subr.mxu0 0.0
    %1935 = vmatpush1.msra.mxu0 0.0
    %1936 = vmatprep.subr.mxu0 0.0
    %1937 = vmatpush1.msra.mxu0 0.0
    %1938 = vmatprep.subr.mxu0 0.0
    %1939 = vmatpush1.msra.mxu0 0.0
    %1940 = vmatprep.subr.mxu0 0.0
    %1941 = vmatpush1.msra.mxu0 0.0
    %1942 = vmatprep.subr.mxu0 0.0
    %1943 = vmatpush1.msra.mxu0 0.0
    %1944 = vmatprep.subr.mxu0 0.0
    %1945 = vmatpush1.msra.mxu0 0.0
    %1946 = vmatprep.subr.mxu0 0.0
    %1947 = vmatpush1.msra.mxu0 0.0
    %1948 = vmatprep.subr.mxu0 0.0
    %1949 = vmatpush1.msra.mxu0 0.0
    %1950 = vmatprep.subr.mxu0 0.0
    %1951 = vmatpush1.msra.mxu0 0.0
    %1952 = vmatprep.subr.mxu0 0.0
    %1953 = vmatpush1.msra.mxu0 0.0
    %1954 = vmatprep.subr.mxu0 0.0
    %1955 = vmatpush1.msra.mxu0 0.0
    %1956 = vmatprep.subr.mxu0 0.0
    %1957 = vmatpush1.msra.mxu0 0.0
    %1958 = vmatprep.subr.mxu0 0.0
    %1959 = vmatpush1.msra.mxu0 0.0
    %1960 = vmatprep.subr.mxu0 0.0
    %1961 = vmatpush1.msra.mxu0 0.0
    %1962 = vmatprep.subr.mxu0 0.0
    %1963 = vmatpush1.msra.mxu0 0.0
    %1964 = vmatprep.subr.mxu0 0.0
    %1965 = vmatpush1.msra.mxu0 0.0
    %1966 = vmatprep.subr.mxu0 0.0
    %1967 = vmatpush1.msra.mxu0 0.0
    %1968 = vmatprep.subr.mxu0 0.0
    %1969 = vmatpush1.msra.mxu0 0.0
    %1970 = vmatprep.subr.mxu0 0.0
    %1971 = vmatpush1.msra.mxu0 0.0
    %1972 = vmatprep.subr.mxu0 0.0
    %1973 = vmatpush1.msra.mxu0 0.0
    %1974 = vmatprep.subr.mxu0 0.0
    %1975 = vmatpush1.msra.mxu0 0.0
    %1976 = vmatprep.subr.mxu0 0.0
    %1977 = vmatpush1.msra.mxu0 0.0
    %1978 = vmatprep.subr.mxu0 0.0
    %1979 = vmatpush1.msra.mxu0 0.0
    %1980 = vmatprep.subr.mxu0 0.0
    %1981 = vmatpush1.msra.mxu0 0.0
    %1982 = vmatprep.subr.mxu0 0.0
    %1983 = vmatpush1.msra.mxu0 0.0
    %1984 = vmatprep.subr.mxu0 0.0
    %1985 = vmatpush1.msra.mxu0 0.0
    %1986 = vmatprep.subr.mxu0 0.0
    %1987 = vmatpush1.msra.mxu0 0.0
    %1988 = vmatprep.subr.mxu0 0.0
    %1989 = vmatpush1.msra.mxu0 0.0
    %1990 = vmatprep.mubr.f32.mxu0 0.0
    %v1991 = vand.u32 %v1551, 4294901760
    %1992 = vmatmul.mubr.f32.gmra.mrb[0].mxu0 %v1991
    %v1993 = vpop.f32.mrb[0].mxu0
    %v1994 = vadd.f32 %v1903, %v1993
    %v1995 = vpop.f32.mrb[0].mxu0
    %1996 = vmatprep.mubr.f32.mxu0 0.0
    %v1997 = vand.u32 %v1554, 4294901760
    %1998 = vmatmul.mubr.f32.gmra.mrb[0].mxu0 %v1997
    %v1999 = vpop.f32.mrb[0].mxu0
    %v2000 = vadd.f32 %v1911, %v1999
    %v2001 = vpop.f32.mrb[0].mxu0
    %2002 = vdwg.mxu0
    %2003 = vmatprep.subr.mxu0 0.0
    %v2004 = vand.u32 %v1538, 4294901760
    %2005 = vmatpush1.msra.mxu0 %v2004
    %2006 = vmatprep.subr.mxu0 0.0
    %v2007 = vand.u32 %v1539, 4294901760
    %2008 = vmatpush1.msra.mxu0 %v2007
    %2009 = vmatprep.subr.mxu0 0.0
    %v2010 = vand.u32 %v1540, 4294901760
    %2011 = vmatpush1.msra.mxu0 %v2010
    %2012 = vmatprep.subr.mxu0 0.0
    %v2013 = vand.u32 %v1541, 4294901760
    %2014 = vmatpush1.msra.mxu0 %v2013
    %2015 = vmatprep.subr.mxu0 0.0
    %2016 = vmatpush1.msra.mxu0 0.0
    %2017 = vmatprep.subr.mxu0 0.0
    %2018 = vmatpush1.msra.mxu0 0.0
    %2019 = vmatprep.subr.mxu0 0.0
    %2020 = vmatpush1.msra.mxu0 0.0
    %2021 = vmatprep.subr.mxu0 0.0
    %2022 = vmatpush1.msra.mxu0 0.0
    %2023 = vmatprep.subr.mxu0 0.0
    %2024 = vmatpush1.msra.mxu0 0.0
    %2025 = vmatprep.subr.mxu0 0.0
    %2026 = vmatpush1.msra.mxu0 0.0
    %2027 = vmatprep.subr.mxu0 0.0
    %2028 = vmatpush1.msra.mxu0 0.0
    %2029 = vmatprep.subr.mxu0 0.0
    %2030 = vmatpush1.msra.mxu0 0.0
    %2031 = vmatprep.subr.mxu0 0.0
    %2032 = vmatpush1.msra.mxu0 0.0
    %2033 = vmatprep.subr.mxu0 0.0
    %2034 = vmatpush1.msra.mxu0 0.0
    %2035 = vmatprep.subr.mxu0 0.0
    %2036 = vmatpush1.msra.mxu0 0.0
    %2037 = vmatprep.subr.mxu0 0.0
    %2038 = vmatpush1.msra.mxu0 0.0
    %2039 = vmatprep.subr.mxu0 0.0
    %2040 = vmatpush1.msra.mxu0 0.0
    %2041 = vmatprep.subr.mxu0 0.0
    %2042 = vmatpush1.msra.mxu0 0.0
    %2043 = vmatprep.subr.mxu0 0.0
    %2044 = vmatpush1.msra.mxu0 0.0
    %2045 = vmatprep.subr.mxu0 0.0
    %2046 = vmatpush1.msra.mxu0 0.0
    %2047 = vmatprep.subr.mxu0 0.0
    %2048 = vmatpush1.msra.mxu0 0.0
    %2049 = vmatprep.subr.mxu0 0.0
    %2050 = vmatpush1.msra.mxu0 0.0
    %2051 = vmatprep.subr.mxu0 0.0
    %2052 = vmatpush1.msra.mxu0 0.0
    %2053 = vmatprep.subr.mxu0 0.0
    %2054 = vmatpush1.msra.mxu0 0.0
    %2055 = vmatprep.subr.mxu0 0.0
    %2056 = vmatpush1.msra.mxu0 0.0
    %2057 = vmatprep.subr.mxu0 0.0
    %2058 = vmatpush1.msra.mxu0 0.0
    %2059 = vmatprep.subr.mxu0 0.0
    %2060 = vmatpush1.msra.mxu0 0.0
    %2061 = vmatprep.subr.mxu0 0.0
    %2062 = vmatpush1.msra.mxu0 0.0
    %2063 = vmatprep.subr.mxu0 0.0
    %2064 = vmatpush1.msra.mxu0 0.0
    %2065 = vmatprep.subr.mxu0 0.0
    %2066 = vmatpush1.msra.mxu0 0.0
    %2067 = vmatprep.subr.mxu0 0.0
    %2068 = vmatpush1.msra.mxu0 0.0
    %2069 = vmatprep.subr.mxu0 0.0
    %2070 = vmatpush1.msra.mxu0 0.0
    %2071 = vmatprep.mubr.f32.mxu0 0.0
    %v2072 = vand.u32 %v1551, 4294901760
    %2073 = vmatmul.mubr.f32.gmra.mrb[0].mxu0 %v2072
    %v2074 = vpop.f32.mrb[0].mxu0
    %v2075 = vadd.f32 %v1994, %v2074
    %v2076 = vpop.f32.mrb[0].mxu0
    %2077 = vmatprep.mubr.f32.mxu0 0.0
    %v2078 = vand.u32 %v1554, 4294901760
    %2079 = vmatmul.mubr.f32.gmra.mrb[0].mxu0 %v2078
    %v2080 = vpop.f32.mrb[0].mxu0
    %v2081 = vadd.f32 %v2000, %v2080
    %v2082 = vpop.f32.mrb[0].mxu0
    %2083 = vdwg.mxu0
    %v2084 = vadd.f32 %v2075, 0.0
    %vm2085 = vcmp.gt.f32.partialorder %v2084, 1.0
    %v2086 = vsel %vm2085, 1, 0
    %v2087 = vcvt.s32.f32 %v2086
    %2089 = vrot.lane.b32.xlu0 %v2084, 8
    %v2090 = vpop.permute.xlu0 %2089
    %vm2092 = vcmask 64512
    %v2093 = vsel %vm2092, %v2087, %v2090
    %v2094 = vmul.f32 %v2084, 0.95
    %v2096 = vrot.slane %v2075, 2
    %v2098 = vadd.f32 %v2094, %v2096
    %v2099 = vsub.f32 %v2098, %v2087
    %vm2100 = vcmp.gt.f32.partialorder %v2099, 1.0
    %v2101 = vsel %vm2100, 1, 0
    %v2102 = vcvt.s32.f32 %v2101
    %2104 = vrot.lane.b32.xlu0 %v2099, 8
    %v2105 = vpop.permute.xlu0 %2104
    %v2107 = vsel %vm2092, %v2102, %v2105
    %v2108 = vmul.f32 %v2099, 0.95
    %v2109 = vrot.slane %v2075, 4
    %v2111 = vadd.f32 %v2108, %v2109
    %v2112 = vsub.f32 %v2111, %v2102
    %vm2113 = vcmp.gt.f32.partialorder %v2112, 1.0
    %v2114 = vsel %vm2113, 1, 0
    %v2115 = vcvt.s32.f32 %v2114
    %2117 = vrot.lane.b32.xlu0 %v2112, 8
    %v2118 = vpop.permute.xlu0 %2117
    %v2120 = vsel %vm2092, %v2115, %v2118
    %v2121 = vmul.f32 %v2112, 0.95
    %v2122 = vrot.slane %v2075, 6
    %v2124 = vadd.f32 %v2121, %v2122
    %v2125 = vsub.f32 %v2124, %v2115
    %vm2126 = vcmp.gt.f32.partialorder %v2125, 1.0
    %v2127 = vsel %vm2126, 1, 0
    %v2128 = vcvt.s32.f32 %v2127
    %2130 = vrot.lane.b32.xlu0 %v2125, 8
    %v2131 = vpop.permute.xlu0 %2130
    %v2133 = vsel %vm2092, %v2128, %v2131
    %v2134 = vmul.f32 %v2125, 0.95
    %v2135 = vadd.f32 %v2134, %v2081
    %v2136 = vsub.f32 %v2135, %v2128
    %vm2137 = vcmp.gt.f32.partialorder %v2136, 1.0
    %v2138 = vsel %vm2137, 1, 0
    %v2139 = vcvt.s32.f32 %v2138
    %2141 = vrot.lane.b32.xlu0 %v2136, 8
    %v2142 = vpop.permute.xlu0 %2141
    %v2144 = vsel %vm2092, %v2139, %v2142
    %v2145 = vmul.f32 %v2136, 0.95
    %v2147 = vrot.slane %v2081, 2
    %v2149 = vadd.f32 %v2145, %v2147
    %v2150 = vsub.f32 %v2149, %v2139
    %vm2151 = vcmp.gt.f32.partialorder %v2150, 1.0
    %v2152 = vsel %vm2151, 1, 0
    %v2153 = vcvt.s32.f32 %v2152
    %2155 = vrot.lane.b32.xlu0 %v2150, 8
    %v2156 = vpop.permute.xlu0 %2155
    %v2158 = vsel %vm2092, %v2153, %v2156
    %v2159 = vmul.f32 %v2150, 0.95
    %v2160 = vrot.slane %v2081, 4
    %v2162 = vadd.f32 %v2159, %v2160
    %v2163 = vsub.f32 %v2162, %v2153
    %vm2164 = vcmp.gt.f32.partialorder %v2163, 1.0
    %v2165 = vsel %vm2164, 1, 0
    %v2166 = vcvt.s32.f32 %v2165
    %2168 = vrot.lane.b32.xlu0 %v2163, 8
    %v2169 = vpop.permute.xlu0 %2168
    %v2171 = vsel %vm2092, %v2166, %v2169
    %v2172 = vmul.f32 %v2163, 0.95
    %v2173 = vrot.slane %v2081, 6
    %v2175 = vadd.f32 %v2172, %v2173
    %v2176 = vsub.f32 %v2175, %v2166
    %vm2177 = vcmp.gt.f32.partialorder %v2176, 1.0
    %v2178 = vsel %vm2177, 1, 0
    %v2179 = vcvt.s32.f32 %v2178
    %2181 = vrot.lane.b32.xlu0 %v2176, 8
    %v2182 = vpop.permute.xlu0 %2181
    %v2184 = vsel %vm2092, %v2179, %v2182
    %2186 = vrot.lane.b32.xlu0 %v2107, 16
    %v2187 = vpop.permute.xlu0 %2186
    %2190 = vrot.lane.b32.xlu0 %v2120, 32
    %v2191 = vpop.permute.xlu0 %2190
    %2194 = vrot.lane.b32.xlu0 %v2133, 48
    %v2195 = vpop.permute.xlu0 %2194
    %2198 = vrot.lane.b32.xlu0 %v2144, 64
    %v2199 = vpop.permute.xlu0 %2198
    %2202 = vrot.lane.b32.xlu0 %v2158, 80
    %v2203 = vpop.permute.xlu0 %2202
    %2206 = vrot.lane.b32.xlu0 %v2171, 96
    %v2207 = vpop.permute.xlu0 %2206
    %2210 = vrot.lane.b32.xlu0 %v2184, 112
    %v2211 = vpop.permute.xlu0 %2210
    %vm2213 = vcmask 130048
    %v2214 = vsel %vm2213, %v2093, %v2187
    %v2215 = vsel %vm1549, %v2214, %v2191
    %vm2216 = vcmask 392192
    %v2217 = vsel %vm2216, %v2215, %v2195
    %vm2218 = vcmask 523264
    %v2219 = vsel %vm2218, %v2217, %v2199
    %vm2220 = vcmask 654336
    %v2221 = vsel %vm2220, %v2219, %v2203
    %vm2222 = vcmask 785408
    %v2223 = vsel %vm2222, %v2221, %v2207
    %vm2224 = vcmask 916480
    %v2225 = vsel %vm2224, %v2223, %v2211
    %2226 = vst [vmem:[#allocation2] sm:$0x3] %v2225
    // Predicated region
    $region22: #{tpu_custom_call.1} parent=1 // pred_check
      _
    $region23: #{tpu_custom_call.1} parent=1 // pred_check_branch
      %2228 = sbr.rel (0) target = $region25
    $region24: #{tpu_custom_call.1} parent=1 // pred_region
      %s2230 = ssub.s32 32, 32
      %2231 = vsyncadd [#allocation3], %s2230
      %s2233 = sshll.u32 [#allocation2], 4
      %s2234 = int_to_ptr.vmem [resolvable:$true] %s2233
      %2236 = dma.vmem_to_hbm [thread:$0]  %s2234, 32, %s5, [#allocation3]
    $region25: #{tpu_custom_call.1} parent=1 // pred_fallthru
      _
    // Predicated region
    $region26: #{tpu_custom_call.1} parent=1 // pred_check
      _
    $region27: #{tpu_custom_call.1} parent=1 // pred_check_branch
      %2238 = sbr.rel (0) target = $region29
    $region28: #{tpu_custom_call.1} parent=1 // pred_region
      %2239 = dma.done [#allocation3], 32
    $region29: #{tpu_custom_call.1} parent=1 // pred_fallthru
      _
    %2240 = vsyncpa [#allocation3], 1

</llo_original>
